<compile_context>
chip_gen: v5e
topology: v5e:2x2
jax: 0.10.0
libtpu: 0.0.40
codegen_flags: <defaults>
</compile_context>

<pallas_src>
import functools

import jax
import jax.numpy as jnp
from jax import lax
from jax.experimental import pallas as pl
from jax.experimental.pallas import tpu as pltpu

LANE = 128
SUBLANE = 8


def _round_up(x, m):
    return ((x + m - 1) // m) * m


# ---------------------------------------------------------------------------
# Fused Pallas kernel: [RNN layer]*L + Linear head, one batch tile per grid step
# ---------------------------------------------------------------------------
def make_fused_kernel(layer_dim, seq, unroll_threshold=128):
    def kernel(*args):
        x_ref = args[0]                              # (seq, TB, Ip)
        layer_refs = args[1:1 + 3 * layer_dim]       # (wih, whh, b) per layer
        wfc_ref = args[1 + 3 * layer_dim]            # (Hp, Op)
        bfc_ref = args[2 + 3 * layer_dim]            # (1, Op)
        out_ref = args[3 + 3 * layer_dim]            # (seq, TB, Op)
        act_ref = args[4 + 3 * layer_dim]            # VMEM scratch (seq, TB, Hp)

        s, tb, hp = act_ref.shape

        for l in range(layer_dim):
            wih = layer_refs[3 * l][...]             # (K, Hp)
            whh = layer_refs[3 * l + 1][...]         # (Hp, Hp) -- held across steps
            bias = layer_refs[3 * l + 2][...]        # (1, Hp)

            inp = x_ref[...] if l == 0 else act_ref[...]
            k = inp.shape[-1]

            # Hoisted input projection + bias: ONE MXU-friendly matmul per layer.
            proj = (
                jnp.dot(inp.reshape(s * tb, k), wih,
                        preferred_element_type=jnp.float32)
                + bias
            )
            act_ref[...] = proj.reshape(s, tb, hp)

            def step(t, h_prev):
                pre = act_ref[t] + jnp.dot(h_prev, whh,
                                           preferred_element_type=jnp.float32)
                h = jnp.maximum(pre, 0.0)            # relu nonlinearity
                act_ref[t] = h                       # overwrite proj with hidden
                return h

            h0 = jnp.zeros((tb, hp), jnp.float32)
            if seq <= unroll_threshold:
                h = h0
                for t in range(seq):                 # fully unrolled (static)
                    h = step(t, h)
            else:
                lax.fori_loop(0, seq, step, h0, unroll=8)

        # Fused FC head on the time-major hidden states (lane-dense output).
        y = act_ref[...].reshape(s * tb, hp)
        out = (
            jnp.dot(y, wfc_ref[...], preferred_element_type=jnp.float32)
            + bfc_ref[...]
        )
        out_ref[...] = out.reshape(s, tb, out_ref.shape[-1]).astype(out_ref.dtype)

    return kernel


# ---------------------------------------------------------------------------
# Wrapper
# ---------------------------------------------------------------------------
@functools.partial(jax.jit, static_argnames=("layer_dim", "out_dim"))
def character_rnn_forward(x, packed, layer_dim, out_dim):
    """x: (batch, seq, in_dim) -> (batch*seq, out_dim)  (matches PyTorch)."""
    batch, seq, in_dim = x.shape
    Ip = packed["rnn"][0][0].shape[0]
    Hp = packed["rnn"][0][1].shape[0]
    Op = packed["fc"][0].shape[1]
    Bp = _round_up(batch, SUBLANE)
    TB = min(Bp, 64)                                 # batch tile (multiple of 8)

    # Small input: pad + go time-major once (activations never leave VMEM).
    x_tm = jnp.transpose(x.astype(jnp.float32), (1, 0, 2))      # (seq, batch, in)
    x_tm = jnp.pad(x_tm, ((0, 0), (0, Bp - batch), (0, Ip - in_dim)))

    args = [x_tm]
    in_specs = [pl.BlockSpec((seq, TB, Ip), lambda i: (0, i, 0))]
    for (wih, whh, b) in packed["rnn"]:
        args += [wih, whh, b]
        in_specs += [
            pl.BlockSpec(wih.shape, lambda i: (0, 0)),
            pl.BlockSpec(whh.shape, lambda i: (0, 0)),
            pl.BlockSpec(b.shape, lambda i: (0, 0)),
        ]
    wfc, bfc = packed["fc"]
    args += [wfc, bfc]
    in_specs += [
        pl.BlockSpec(wfc.shape, lambda i: (0, 0)),
        pl.BlockSpec(bfc.shape, lambda i: (0, 0)),
    ]

    out_tm = pl.pallas_call(
        make_fused_kernel(layer_dim, seq),
        out_shape=jax.ShapeDtypeStruct((seq, Bp, Op), jnp.float32),
        grid=(Bp // TB,),
        in_specs=in_specs,
        out_specs=pl.BlockSpec((seq, TB, Op), lambda i: (0, i, 0)),
        scratch_shapes=[pltpu.VMEM((seq, TB, Hp), jnp.float32)],
        compiler_params=pltpu.CompilerParams(
            dimension_semantics=("parallel",),
            vmem_limit_bytes=48 * 1024 * 1024,
        ),
    )(*args)

    # Tiny FC output: permute to PyTorch's batch-major row order, strip padding.
    out = jnp.transpose(out_tm, (1, 0, 2))[:batch, :, :out_dim]
    return out.reshape(batch * seq, out_dim)


# ---------------------------------------------------------------------------
# Parameter init (PyTorch-style uniform) + packing into padded/transposed form
# ---------------------------------------------------------------------------
def init_raw_params(key, in_dim, hidden_dim, layer_dim, out_dim):
    bound = 1.0 / jnp.sqrt(jnp.float32(hidden_dim))
    raw = {"rnn": []}
    for l in range(layer_dim):
        layer_in = in_dim if l == 0 else hidden_dim
        key, k1, k2, k3, k4 = jax.random.split(key, 5)
        w_ih = jax.random.uniform(k1, (hidden_dim, layer_in), jnp.float32, -bound, bound)
        w_hh = jax.random.uniform(k2, (hidden_dim, hidden_dim), jnp.float32, -bound, bound)
        b_ih = jax.random.uniform(k3, (hidden_dim,), jnp.float32, -bound, bound)
        b_hh = jax.random.uniform(k4, (hidden_dim,), jnp.float32, -bound, bound)
        raw["rnn"].append((w_ih, w_hh, b_ih, b_hh))
    key, k5, k6 = jax.random.split(key, 3)
    w_fc = jax.random.uniform(k5, (out_dim, hidden_dim), jnp.float32, -bound, bound)
    b_fc = jax.random.uniform(k6, (out_dim,), jnp.float32, -bound, bound)
    raw["fc"] = (w_fc, b_fc)
    return raw


def pack_params(raw, in_dim, hidden_dim, layer_dim, out_dim):
    """Pre-transpose, fuse biases, and zero-pad to lane/sublane-dense shapes."""
    Hp = _round_up(hidden_dim, LANE)
    Ip = _round_up(in_dim, LANE)
    Op = _round_up(out_dim, LANE)
    packed = {"rnn": []}
    for l in range(layer_dim):
        w_ih, w_hh, b_ih, b_hh = raw["rnn"][l]
        kin = in_dim if l == 0 else hidden_dim
        kin_p = Ip if l == 0 else Hp
        wih_t = jnp.zeros((kin_p, Hp), jnp.float32).at[:kin, :hidden_dim].set(w_ih.T)
        whh_t = jnp.zeros((Hp, Hp), jnp.float32).at[:hidden_dim, :hidden_dim].set(w_hh.T)
        bias = jnp.zeros((1, Hp), jnp.float32).at[0, :hidden_dim].set(b_ih + b_hh)
        packed["rnn"].append((wih_t, whh_t, bias))
    w_fc, b_fc = raw["fc"]
    wfc_t = jnp.zeros((Hp, Op), jnp.float32).at[:hidden_dim, :out_dim].set(w_fc.T)
    bfc = jnp.zeros((1, Op), jnp.float32).at[0, :out_dim].set(b_fc)
    packed["fc"] = (wfc_t, bfc)
    return packed


# ---------------------------------------------------------------------------
# Pure-JAX reference (same math, no Pallas) for a sanity check
# ---------------------------------------------------------------------------
def reference_forward(x, raw, layer_dim):
    batch, seq, _ = x.shape
    h_seq = x.astype(jnp.float32)
    for l in range(layer_dim):
        w_ih, w_hh, b_ih, b_hh = raw["rnn"][l]
        hidden = w_hh.shape[0]
        h = jnp.zeros((batch, hidden), jnp.float32)
        outs = []
        for t in range(seq):
            h = jnp.maximum(h_seq[:, t, :] @ w_ih.T + h @ w_hh.T + b_ih + b_hh, 0.0)
            outs.append(h)
        h_seq = jnp.stack(outs, axis=1)
    w_fc, b_fc = raw["fc"]
    out = h_seq.reshape(-1, h_seq.shape[-1])
    return out @ w_fc.T + b_fc


# ---------------------------------------------------------------------------
if __name__ == "__main__":
    # small shapes consistent with forward(): x is (batch, seq, in_dim)
    batch, seq, in_dim = 2, 8, 16
    hidden_dim, layer_dim, out_dim = 32, 2, 10

    key = jax.random.PRNGKey(0)
    key, kx = jax.random.split(key)
    x = jax.random.normal(kx, (batch, seq, in_dim), jnp.float32)

    raw = init_raw_params(key, in_dim, hidden_dim, layer_dim, out_dim)
    packed = pack_params(raw, in_dim, hidden_dim, layer_dim, out_dim)

    out = character_rnn_forward(x, packed, layer_dim, out_dim)
    out = jax.block_until_ready(out)

    ref = reference_forward(x, raw, layer_dim)
    assert out.shape == (batch * seq, out_dim), out.shape
    assert jnp.allclose(out, ref, atol=1e-4, rtol=1e-4), "mismatch vs reference"

    print("KERNEL_OK")
</pallas_src>

<mosaic_0001>
module attributes {stable_mosaic.version = 11 : i64} {
  func.func @kernel(%arg0: i32, %arg1: memref<8x8x128xf32, #tpu.memory_space<vmem>>, %arg2: memref<128x128xf32, #tpu.memory_space<vmem>>, %arg3: memref<128x128xf32, #tpu.memory_space<vmem>>, %arg4: memref<1x128xf32, #tpu.memory_space<vmem>>, %arg5: memref<128x128xf32, #tpu.memory_space<vmem>>, %arg6: memref<128x128xf32, #tpu.memory_space<vmem>>, %arg7: memref<1x128xf32, #tpu.memory_space<vmem>>, %arg8: memref<128x128xf32, #tpu.memory_space<vmem>>, %arg9: memref<1x128xf32, #tpu.memory_space<vmem>>, %arg10: memref<8x8x128xf32, #tpu.memory_space<vmem>>, %arg11: memref<8x8x128xf32, #tpu.memory_space<vmem>>) attributes {dimension_semantics = [#tpu.dimension_semantics<parallel>], iteration_bounds = array<i64: 1>, scalar_prefetch = 0 : i64, scratch_operands = 1 : i64, tpu.core_type = #tpu.core_type<tc>, window_params = [{transform_indices = @transform_0, window_bounds = array<i64: 8, 8, 128>}, {pipeline_mode = #tpu.pipeline_mode<synchronous>, transform_indices = @transform_1, window_bounds = array<i64: 128, 128>}, {pipeline_mode = #tpu.pipeline_mode<synchronous>, transform_indices = @transform_2, window_bounds = array<i64: 128, 128>}, {pipeline_mode = #tpu.pipeline_mode<synchronous>, transform_indices = @transform_3, window_bounds = array<i64: 1, 128>}, {pipeline_mode = #tpu.pipeline_mode<synchronous>, transform_indices = @transform_4, window_bounds = array<i64: 128, 128>}, {pipeline_mode = #tpu.pipeline_mode<synchronous>, transform_indices = @transform_5, window_bounds = array<i64: 128, 128>}, {pipeline_mode = #tpu.pipeline_mode<synchronous>, transform_indices = @transform_6, window_bounds = array<i64: 1, 128>}, {pipeline_mode = #tpu.pipeline_mode<synchronous>, transform_indices = @transform_7, window_bounds = array<i64: 128, 128>}, {pipeline_mode = #tpu.pipeline_mode<synchronous>, transform_indices = @transform_8, window_bounds = array<i64: 1, 128>}, {transform_indices = @transform_9, window_bounds = array<i64: 8, 8, 128>}]} {
    %c0 = arith.constant 0 : index
    %c0_0 = arith.constant 0 : index
    %0 = vector.load %arg2[%c0, %c0_0] : memref<128x128xf32, #tpu.memory_space<vmem>>, vector<128x128xf32>
    %c0_1 = arith.constant 0 : index
    %c0_2 = arith.constant 0 : index
    %1 = vector.load %arg3[%c0_1, %c0_2] : memref<128x128xf32, #tpu.memory_space<vmem>>, vector<128x128xf32>
    %c0_3 = arith.constant 0 : index
    %c0_4 = arith.constant 0 : index
    %2 = vector.load %arg4[%c0_3, %c0_4] : memref<1x128xf32, #tpu.memory_space<vmem>>, vector<1x128xf32>
    %c0_5 = arith.constant 0 : index
    %c0_6 = arith.constant 0 : index
    %c0_7 = arith.constant 0 : index
    %3 = vector.load %arg1[%c0_5, %c0_6, %c0_7] : memref<8x8x128xf32, #tpu.memory_space<vmem>>, vector<8x8x128xf32>
    %4 = vector.shape_cast %3 : vector<8x8x128xf32> to vector<64x128xf32>
    %cst = arith.constant dense<0.000000e+00> : vector<64x128xf32>
    %5 = tpu.matmul %4, %0, %cst {dimension_numbers = #tpu.dot_dimension_numbers<[1], [0], [0], [1], [0, 0, 1, 1], [], []>} : vector<64x128xf32>, vector<128x128xf32>, vector<64x128xf32> -> vector<64x128xf32>
    %6 = vector.broadcast %2 : vector<1x128xf32> to vector<64x128xf32>
    %7 = arith.addf %5, %6 : vector<64x128xf32>
    %8 = vector.shape_cast %7 : vector<64x128xf32> to vector<8x8x128xf32>
    %c0_8 = arith.constant 0 : index
    %c0_9 = arith.constant 0 : index
    %c0_10 = arith.constant 0 : index
    %9 = vector.load %arg11[%c0_8, %c0_9, %c0_10] : memref<8x8x128xf32, #tpu.memory_space<vmem>>, vector<8x8x128xf32>
    tpu.vector_store %arg11[%c0_8, %c0_9, %c0_10], %8 {strides = array<i32>} : memref<8x8x128xf32, #tpu.memory_space<vmem>>, vector<8x8x128xf32>,
    %cst_11 = arith.constant 0.000000e+00 : f32
    %10 = vector.broadcast %cst_11 : f32 to vector<8x128xf32>
    %c0_12 = arith.constant 0 : index
    %c0_13 = arith.constant 0 : index
    %c0_14 = arith.constant 0 : index
    %11 = vector.load %arg11[%c0_12, %c0_13, %c0_14] : memref<8x8x128xf32, #tpu.memory_space<vmem>>, vector<1x8x128xf32>
    %12 = vector.shape_cast %11 : vector<1x8x128xf32> to vector<8x128xf32>
    %cst_15 = arith.constant dense<0.000000e+00> : vector<8x128xf32>
    %13 = tpu.matmul %10, %1, %cst_15 {dimension_numbers = #tpu.dot_dimension_numbers<[1], [0], [0], [1], [0, 0, 1, 1], [], []>} : vector<8x128xf32>, vector<128x128xf32>, vector<8x128xf32> -> vector<8x128xf32>
    %14 = arith.addf %12, %13 : vector<8x128xf32>
    %cst_16 = arith.constant 0.000000e+00 : f32
    %15 = vector.broadcast %cst_16 : f32 to vector<8x128xf32>
    %16 = arith.maximumf %14, %15 : vector<8x128xf32>
    %c0_17 = arith.constant 0 : index
    %c0_18 = arith.constant 0 : index
    %c0_19 = arith.constant 0 : index
    %17 = vector.load %arg11[%c0_17, %c0_18, %c0_19] : memref<8x8x128xf32, #tpu.memory_space<vmem>>, vector<1x8x128xf32>
    %18 = vector.shape_cast %17 : vector<1x8x128xf32> to vector<8x128xf32>
    %19 = vector.shape_cast %16 : vector<8x128xf32> to vector<1x8x128xf32>
    tpu.vector_store %arg11[%c0_17, %c0_18, %c0_19], %19 {strides = array<i32>} : memref<8x8x128xf32, #tpu.memory_space<vmem>>, vector<1x8x128xf32>,
    %c1 = arith.constant 1 : index
    %c0_20 = arith.constant 0 : index
    %c0_21 = arith.constant 0 : index
    %20 = vector.load %arg11[%c1, %c0_20, %c0_21] : memref<8x8x128xf32, #tpu.memory_space<vmem>>, vector<1x8x128xf32>
    %21 = vector.shape_cast %20 : vector<1x8x128xf32> to vector<8x128xf32>
    %cst_22 = arith.constant dense<0.000000e+00> : vector<8x128xf32>
    %22 = tpu.matmul %16, %1, %cst_22 {dimension_numbers = #tpu.dot_dimension_numbers<[1], [0], [0], [1], [0, 0, 1, 1], [], []>} : vector<8x128xf32>, vector<128x128xf32>, vector<8x128xf32> -> vector<8x128xf32>
    %23 = arith.addf %21, %22 : vector<8x128xf32>
    %cst_23 = arith.constant 0.000000e+00 : f32
    %24 = vector.broadcast %cst_23 : f32 to vector<8x128xf32>
    %25 = arith.maximumf %23, %24 : vector<8x128xf32>
    %c1_24 = arith.constant 1 : index
    %c0_25 = arith.constant 0 : index
    %c0_26 = arith.constant 0 : index
    %26 = vector.load %arg11[%c1_24, %c0_25, %c0_26] : memref<8x8x128xf32, #tpu.memory_space<vmem>>, vector<1x8x128xf32>
    %27 = vector.shape_cast %26 : vector<1x8x128xf32> to vector<8x128xf32>
    %28 = vector.shape_cast %25 : vector<8x128xf32> to vector<1x8x128xf32>
    tpu.vector_store %arg11[%c1_24, %c0_25, %c0_26], %28 {strides = array<i32>} : memref<8x8x128xf32, #tpu.memory_space<vmem>>, vector<1x8x128xf32>,
    %c2 = arith.constant 2 : index
    %c0_27 = arith.constant 0 : index
    %c0_28 = arith.constant 0 : index
    %29 = vector.load %arg11[%c2, %c0_27, %c0_28] : memref<8x8x128xf32, #tpu.memory_space<vmem>>, vector<1x8x128xf32>
    %30 = vector.shape_cast %29 : vector<1x8x128xf32> to vector<8x128xf32>
    %cst_29 = arith.constant dense<0.000000e+00> : vector<8x128xf32>
    %31 = tpu.matmul %25, %1, %cst_29 {dimension_numbers = #tpu.dot_dimension_numbers<[1], [0], [0], [1], [0, 0, 1, 1], [], []>} : vector<8x128xf32>, vector<128x128xf32>, vector<8x128xf32> -> vector<8x128xf32>
    %32 = arith.addf %30, %31 : vector<8x128xf32>
    %cst_30 = arith.constant 0.000000e+00 : f32
    %33 = vector.broadcast %cst_30 : f32 to vector<8x128xf32>
    %34 = arith.maximumf %32, %33 : vector<8x128xf32>
    %c2_31 = arith.constant 2 : index
    %c0_32 = arith.constant 0 : index
    %c0_33 = arith.constant 0 : index
    %35 = vector.load %arg11[%c2_31, %c0_32, %c0_33] : memref<8x8x128xf32, #tpu.memory_space<vmem>>, vector<1x8x128xf32>
    %36 = vector.shape_cast %35 : vector<1x8x128xf32> to vector<8x128xf32>
    %37 = vector.shape_cast %34 : vector<8x128xf32> to vector<1x8x128xf32>
    tpu.vector_store %arg11[%c2_31, %c0_32, %c0_33], %37 {strides = array<i32>} : memref<8x8x128xf32, #tpu.memory_space<vmem>>, vector<1x8x128xf32>,
    %c3 = arith.constant 3 : index
    %c0_34 = arith.constant 0 : index
    %c0_35 = arith.constant 0 : index
    %38 = vector.load %arg11[%c3, %c0_34, %c0_35] : memref<8x8x128xf32, #tpu.memory_space<vmem>>, vector<1x8x128xf32>
    %39 = vector.shape_cast %38 : vector<1x8x128xf32> to vector<8x128xf32>
    %cst_36 = arith.constant dense<0.000000e+00> : vector<8x128xf32>
    %40 = tpu.matmul %34, %1, %cst_36 {dimension_numbers = #tpu.dot_dimension_numbers<[1], [0], [0], [1], [0, 0, 1, 1], [], []>} : vector<8x128xf32>, vector<128x128xf32>, vector<8x128xf32> -> vector<8x128xf32>
    %41 = arith.addf %39, %40 : vector<8x128xf32>
    %cst_37 = arith.constant 0.000000e+00 : f32
    %42 = vector.broadcast %cst_37 : f32 to vector<8x128xf32>
    %43 = arith.maximumf %41, %42 : vector<8x128xf32>
    %c3_38 = arith.constant 3 : index
    %c0_39 = arith.constant 0 : index
    %c0_40 = arith.constant 0 : index
    %44 = vector.load %arg11[%c3_38, %c0_39, %c0_40] : memref<8x8x128xf32, #tpu.memory_space<vmem>>, vector<1x8x128xf32>
    %45 = vector.shape_cast %44 : vector<1x8x128xf32> to vector<8x128xf32>
    %46 = vector.shape_cast %43 : vector<8x128xf32> to vector<1x8x128xf32>
    tpu.vector_store %arg11[%c3_38, %c0_39, %c0_40], %46 {strides = array<i32>} : memref<8x8x128xf32, #tpu.memory_space<vmem>>, vector<1x8x128xf32>,
    %c4 = arith.constant 4 : index
    %c0_41 = arith.constant 0 : index
    %c0_42 = arith.constant 0 : index
    %47 = vector.load %arg11[%c4, %c0_41, %c0_42] : memref<8x8x128xf32, #tpu.memory_space<vmem>>, vector<1x8x128xf32>
    %48 = vector.shape_cast %47 : vector<1x8x128xf32> to vector<8x128xf32>
    %cst_43 = arith.constant dense<0.000000e+00> : vector<8x128xf32>
    %49 = tpu.matmul %43, %1, %cst_43 {dimension_numbers = #tpu.dot_dimension_numbers<[1], [0], [0], [1], [0, 0, 1, 1], [], []>} : vector<8x128xf32>, vector<128x128xf32>, vector<8x128xf32> -> vector<8x128xf32>
    %50 = arith.addf %48, %49 : vector<8x128xf32>
    %cst_44 = arith.constant 0.000000e+00 : f32
    %51 = vector.broadcast %cst_44 : f32 to vector<8x128xf32>
    %52 = arith.maximumf %50, %51 : vector<8x128xf32>
    %c4_45 = arith.constant 4 : index
    %c0_46 = arith.constant 0 : index
    %c0_47 = arith.constant 0 : index
    %53 = vector.load %arg11[%c4_45, %c0_46, %c0_47] : memref<8x8x128xf32, #tpu.memory_space<vmem>>, vector<1x8x128xf32>
    %54 = vector.shape_cast %53 : vector<1x8x128xf32> to vector<8x128xf32>
    %55 = vector.shape_cast %52 : vector<8x128xf32> to vector<1x8x128xf32>
    tpu.vector_store %arg11[%c4_45, %c0_46, %c0_47], %55 {strides = array<i32>} : memref<8x8x128xf32, #tpu.memory_space<vmem>>, vector<1x8x128xf32>,
    %c5 = arith.constant 5 : index
    %c0_48 = arith.constant 0 : index
    %c0_49 = arith.constant 0 : index
    %56 = vector.load %arg11[%c5, %c0_48, %c0_49] : memref<8x8x128xf32, #tpu.memory_space<vmem>>, vector<1x8x128xf32>
    %57 = vector.shape_cast %56 : vector<1x8x128xf32> to vector<8x128xf32>
    %cst_50 = arith.constant dense<0.000000e+00> : vector<8x128xf32>
    %58 = tpu.matmul %52, %1, %cst_50 {dimension_numbers = #tpu.dot_dimension_numbers<[1], [0], [0], [1], [0, 0, 1, 1], [], []>} : vector<8x128xf32>, vector<128x128xf32>, vector<8x128xf32> -> vector<8x128xf32>
    %59 = arith.addf %57, %58 : vector<8x128xf32>
    %cst_51 = arith.constant 0.000000e+00 : f32
    %60 = vector.broadcast %cst_51 : f32 to vector<8x128xf32>
    %61 = arith.maximumf %59, %60 : vector<8x128xf32>
    %c5_52 = arith.constant 5 : index
    %c0_53 = arith.constant 0 : index
    %c0_54 = arith.constant 0 : index
    %62 = vector.load %arg11[%c5_52, %c0_53, %c0_54] : memref<8x8x128xf32, #tpu.memory_space<vmem>>, vector<1x8x128xf32>
    %63 = vector.shape_cast %62 : vector<1x8x128xf32> to vector<8x128xf32>
    %64 = vector.shape_cast %61 : vector<8x128xf32> to vector<1x8x128xf32>
    tpu.vector_store %arg11[%c5_52, %c0_53, %c0_54], %64 {strides = array<i32>} : memref<8x8x128xf32, #tpu.memory_space<vmem>>, vector<1x8x128xf32>,
    %c6 = arith.constant 6 : index
    %c0_55 = arith.constant 0 : index
    %c0_56 = arith.constant 0 : index
    %65 = vector.load %arg11[%c6, %c0_55, %c0_56] : memref<8x8x128xf32, #tpu.memory_space<vmem>>, vector<1x8x128xf32>
    %66 = vector.shape_cast %65 : vector<1x8x128xf32> to vector<8x128xf32>
    %cst_57 = arith.constant dense<0.000000e+00> : vector<8x128xf32>
    %67 = tpu.matmul %61, %1, %cst_57 {dimension_numbers = #tpu.dot_dimension_numbers<[1], [0], [0], [1], [0, 0, 1, 1], [], []>} : vector<8x128xf32>, vector<128x128xf32>, vector<8x128xf32> -> vector<8x128xf32>
    %68 = arith.addf %66, %67 : vector<8x128xf32>
    %cst_58 = arith.constant 0.000000e+00 : f32
    %69 = vector.broadcast %cst_58 : f32 to vector<8x128xf32>
    %70 = arith.maximumf %68, %69 : vector<8x128xf32>
    %c6_59 = arith.constant 6 : index
    %c0_60 = arith.constant 0 : index
    %c0_61 = arith.constant 0 : index
    %71 = vector.load %arg11[%c6_59, %c0_60, %c0_61] : memref<8x8x128xf32, #tpu.memory_space<vmem>>, vector<1x8x128xf32>
    %72 = vector.shape_cast %71 : vector<1x8x128xf32> to vector<8x128xf32>
    %73 = vector.shape_cast %70 : vector<8x128xf32> to vector<1x8x128xf32>
    tpu.vector_store %arg11[%c6_59, %c0_60, %c0_61], %73 {strides = array<i32>} : memref<8x8x128xf32, #tpu.memory_space<vmem>>, vector<1x8x128xf32>,
    %c7 = arith.constant 7 : index
    %c0_62 = arith.constant 0 : index
    %c0_63 = arith.constant 0 : index
    %74 = vector.load %arg11[%c7, %c0_62, %c0_63] : memref<8x8x128xf32, #tpu.memory_space<vmem>>, vector<1x8x128xf32>
    %75 = vector.shape_cast %74 : vector<1x8x128xf32> to vector<8x128xf32>
    %cst_64 = arith.constant dense<0.000000e+00> : vector<8x128xf32>
    %76 = tpu.matmul %70, %1, %cst_64 {dimension_numbers = #tpu.dot_dimension_numbers<[1], [0], [0], [1], [0, 0, 1, 1], [], []>} : vector<8x128xf32>, vector<128x128xf32>, vector<8x128xf32> -> vector<8x128xf32>
    %77 = arith.addf %75, %76 : vector<8x128xf32>
    %cst_65 = arith.constant 0.000000e+00 : f32
    %78 = vector.broadcast %cst_65 : f32 to vector<8x128xf32>
    %79 = arith.maximumf %77, %78 : vector<8x128xf32>
    %c7_66 = arith.constant 7 : index
    %c0_67 = arith.constant 0 : index
    %c0_68 = arith.constant 0 : index
    %80 = vector.load %arg11[%c7_66, %c0_67, %c0_68] : memref<8x8x128xf32, #tpu.memory_space<vmem>>, vector<1x8x128xf32>
    %81 = vector.shape_cast %80 : vector<1x8x128xf32> to vector<8x128xf32>
    %82 = vector.shape_cast %79 : vector<8x128xf32> to vector<1x8x128xf32>
    tpu.vector_store %arg11[%c7_66, %c0_67, %c0_68], %82 {strides = array<i32>} : memref<8x8x128xf32, #tpu.memory_space<vmem>>, vector<1x8x128xf32>,
    %c0_69 = arith.constant 0 : index
    %c0_70 = arith.constant 0 : index
    %83 = vector.load %arg5[%c0_69, %c0_70] : memref<128x128xf32, #tpu.memory_space<vmem>>, vector<128x128xf32>
    %c0_71 = arith.constant 0 : index
    %c0_72 = arith.constant 0 : index
    %84 = vector.load %arg6[%c0_71, %c0_72] : memref<128x128xf32, #tpu.memory_space<vmem>>, vector<128x128xf32>
    %c0_73 = arith.constant 0 : index
    %c0_74 = arith.constant 0 : index
    %85 = vector.load %arg7[%c0_73, %c0_74] : memref<1x128xf32, #tpu.memory_space<vmem>>, vector<1x128xf32>
    %c0_75 = arith.constant 0 : index
    %c0_76 = arith.constant 0 : index
    %c0_77 = arith.constant 0 : index
    %86 = vector.load %arg11[%c0_75, %c0_76, %c0_77] : memref<8x8x128xf32, #tpu.memory_space<vmem>>, vector<8x8x128xf32>
    %87 = vector.shape_cast %86 : vector<8x8x128xf32> to vector<64x128xf32>
    %cst_78 = arith.constant dense<0.000000e+00> : vector<64x128xf32>
    %88 = tpu.matmul %87, %83, %cst_78 {dimension_numbers = #tpu.dot_dimension_numbers<[1], [0], [0], [1], [0, 0, 1, 1], [], []>} : vector<64x128xf32>, vector<128x128xf32>, vector<64x128xf32> -> vector<64x128xf32>
    %89 = vector.broadcast %85 : vector<1x128xf32> to vector<64x128xf32>
    %90 = arith.addf %88, %89 : vector<64x128xf32>
    %91 = vector.shape_cast %90 : vector<64x128xf32> to vector<8x8x128xf32>
    %c0_79 = arith.constant 0 : index
    %c0_80 = arith.constant 0 : index
    %c0_81 = arith.constant 0 : index
    %92 = vector.load %arg11[%c0_79, %c0_80, %c0_81] : memref<8x8x128xf32, #tpu.memory_space<vmem>>, vector<8x8x128xf32>
    tpu.vector_store %arg11[%c0_79, %c0_80, %c0_81], %91 {strides = array<i32>} : memref<8x8x128xf32, #tpu.memory_space<vmem>>, vector<8x8x128xf32>,
    %cst_82 = arith.constant 0.000000e+00 : f32
    %93 = vector.broadcast %cst_82 : f32 to vector<8x128xf32>
    %c0_83 = arith.constant 0 : index
    %c0_84 = arith.constant 0 : index
    %c0_85 = arith.constant 0 : index
    %94 = vector.load %arg11[%c0_83, %c0_84, %c0_85] : memref<8x8x128xf32, #tpu.memory_space<vmem>>, vector<1x8x128xf32>
    %95 = vector.shape_cast %94 : vector<1x8x128xf32> to vector<8x128xf32>
    %cst_86 = arith.constant dense<0.000000e+00> : vector<8x128xf32>
    %96 = tpu.matmul %93, %84, %cst_86 {dimension_numbers = #tpu.dot_dimension_numbers<[1], [0], [0], [1], [0, 0, 1, 1], [], []>} : vector<8x128xf32>, vector<128x128xf32>, vector<8x128xf32> -> vector<8x128xf32>
    %97 = arith.addf %95, %96 : vector<8x128xf32>
    %cst_87 = arith.constant 0.000000e+00 : f32
    %98 = vector.broadcast %cst_87 : f32 to vector<8x128xf32>
    %99 = arith.maximumf %97, %98 : vector<8x128xf32>
    %c0_88 = arith.constant 0 : index
    %c0_89 = arith.constant 0 : index
    %c0_90 = arith.constant 0 : index
    %100 = vector.load %arg11[%c0_88, %c0_89, %c0_90] : memref<8x8x128xf32, #tpu.memory_space<vmem>>, vector<1x8x128xf32>
    %101 = vector.shape_cast %100 : vector<1x8x128xf32> to vector<8x128xf32>
    %102 = vector.shape_cast %99 : vector<8x128xf32> to vector<1x8x128xf32>
    tpu.vector_store %arg11[%c0_88, %c0_89, %c0_90], %102 {strides = array<i32>} : memref<8x8x128xf32, #tpu.memory_space<vmem>>, vector<1x8x128xf32>,
    %c1_91 = arith.constant 1 : index
    %c0_92 = arith.constant 0 : index
    %c0_93 = arith.constant 0 : index
    %103 = vector.load %arg11[%c1_91, %c0_92, %c0_93] : memref<8x8x128xf32, #tpu.memory_space<vmem>>, vector<1x8x128xf32>
    %104 = vector.shape_cast %103 : vector<1x8x128xf32> to vector<8x128xf32>
    %cst_94 = arith.constant dense<0.000000e+00> : vector<8x128xf32>
    %105 = tpu.matmul %99, %84, %cst_94 {dimension_numbers = #tpu.dot_dimension_numbers<[1], [0], [0], [1], [0, 0, 1, 1], [], []>} : vector<8x128xf32>, vector<128x128xf32>, vector<8x128xf32> -> vector<8x128xf32>
    %106 = arith.addf %104, %105 : vector<8x128xf32>
    %cst_95 = arith.constant 0.000000e+00 : f32
    %107 = vector.broadcast %cst_95 : f32 to vector<8x128xf32>
    %108 = arith.maximumf %106, %107 : vector<8x128xf32>
    %c1_96 = arith.constant 1 : index
    %c0_97 = arith.constant 0 : index
    %c0_98 = arith.constant 0 : index
    %109 = vector.load %arg11[%c1_96, %c0_97, %c0_98] : memref<8x8x128xf32, #tpu.memory_space<vmem>>, vector<1x8x128xf32>
    %110 = vector.shape_cast %109 : vector<1x8x128xf32> to vector<8x128xf32>
    %111 = vector.shape_cast %108 : vector<8x128xf32> to vector<1x8x128xf32>
    tpu.vector_store %arg11[%c1_96, %c0_97, %c0_98], %111 {strides = array<i32>} : memref<8x8x128xf32, #tpu.memory_space<vmem>>, vector<1x8x128xf32>,
    %c2_99 = arith.constant 2 : index
    %c0_100 = arith.constant 0 : index
    %c0_101 = arith.constant 0 : index
    %112 = vector.load %arg11[%c2_99, %c0_100, %c0_101] : memref<8x8x128xf32, #tpu.memory_space<vmem>>, vector<1x8x128xf32>
    %113 = vector.shape_cast %112 : vector<1x8x128xf32> to vector<8x128xf32>
    %cst_102 = arith.constant dense<0.000000e+00> : vector<8x128xf32>
    %114 = tpu.matmul %108, %84, %cst_102 {dimension_numbers = #tpu.dot_dimension_numbers<[1], [0], [0], [1], [0, 0, 1, 1], [], []>} : vector<8x128xf32>, vector<128x128xf32>, vector<8x128xf32> -> vector<8x128xf32>
    %115 = arith.addf %113, %114 : vector<8x128xf32>
    %cst_103 = arith.constant 0.000000e+00 : f32
    %116 = vector.broadcast %cst_103 : f32 to vector<8x128xf32>
    %117 = arith.maximumf %115, %116 : vector<8x128xf32>
    %c2_104 = arith.constant 2 : index
    %c0_105 = arith.constant 0 : index
    %c0_106 = arith.constant 0 : index
    %118 = vector.load %arg11[%c2_104, %c0_105, %c0_106] : memref<8x8x128xf32, #tpu.memory_space<vmem>>, vector<1x8x128xf32>
    %119 = vector.shape_cast %118 : vector<1x8x128xf32> to vector<8x128xf32>
    %120 = vector.shape_cast %117 : vector<8x128xf32> to vector<1x8x128xf32>
    tpu.vector_store %arg11[%c2_104, %c0_105, %c0_106], %120 {strides = array<i32>} : memref<8x8x128xf32, #tpu.memory_space<vmem>>, vector<1x8x128xf32>,
    %c3_107 = arith.constant 3 : index
    %c0_108 = arith.constant 0 : index
    %c0_109 = arith.constant 0 : index
    %121 = vector.load %arg11[%c3_107, %c0_108, %c0_109] : memref<8x8x128xf32, #tpu.memory_space<vmem>>, vector<1x8x128xf32>
    %122 = vector.shape_cast %121 : vector<1x8x128xf32> to vector<8x128xf32>
    %cst_110 = arith.constant dense<0.000000e+00> : vector<8x128xf32>
    %123 = tpu.matmul %117, %84, %cst_110 {dimension_numbers = #tpu.dot_dimension_numbers<[1], [0], [0], [1], [0, 0, 1, 1], [], []>} : vector<8x128xf32>, vector<128x128xf32>, vector<8x128xf32> -> vector<8x128xf32>
    %124 = arith.addf %122, %123 : vector<8x128xf32>
    %cst_111 = arith.constant 0.000000e+00 : f32
    %125 = vector.broadcast %cst_111 : f32 to vector<8x128xf32>
    %126 = arith.maximumf %124, %125 : vector<8x128xf32>
    %c3_112 = arith.constant 3 : index
    %c0_113 = arith.constant 0 : index
    %c0_114 = arith.constant 0 : index
    %127 = vector.load %arg11[%c3_112, %c0_113, %c0_114] : memref<8x8x128xf32, #tpu.memory_space<vmem>>, vector<1x8x128xf32>
    %128 = vector.shape_cast %127 : vector<1x8x128xf32> to vector<8x128xf32>
    %129 = vector.shape_cast %126 : vector<8x128xf32> to vector<1x8x128xf32>
    tpu.vector_store %arg11[%c3_112, %c0_113, %c0_114], %129 {strides = array<i32>} : memref<8x8x128xf32, #tpu.memory_space<vmem>>, vector<1x8x128xf32>,
    %c4_115 = arith.constant 4 : index
    %c0_116 = arith.constant 0 : index
    %c0_117 = arith.constant 0 : index
    %130 = vector.load %arg11[%c4_115, %c0_116, %c0_117] : memref<8x8x128xf32, #tpu.memory_space<vmem>>, vector<1x8x128xf32>
    %131 = vector.shape_cast %130 : vector<1x8x128xf32> to vector<8x128xf32>
    %cst_118 = arith.constant dense<0.000000e+00> : vector<8x128xf32>
    %132 = tpu.matmul %126, %84, %cst_118 {dimension_numbers = #tpu.dot_dimension_numbers<[1], [0], [0], [1], [0, 0, 1, 1], [], []>} : vector<8x128xf32>, vector<128x128xf32>, vector<8x128xf32> -> vector<8x128xf32>
    %133 = arith.addf %131, %132 : vector<8x128xf32>
    %cst_119 = arith.constant 0.000000e+00 : f32
    %134 = vector.broadcast %cst_119 : f32 to vector<8x128xf32>
    %135 = arith.maximumf %133, %134 : vector<8x128xf32>
    %c4_120 = arith.constant 4 : index
    %c0_121 = arith.constant 0 : index
    %c0_122 = arith.constant 0 : index
    %136 = vector.load %arg11[%c4_120, %c0_121, %c0_122] : memref<8x8x128xf32, #tpu.memory_space<vmem>>, vector<1x8x128xf32>
    %137 = vector.shape_cast %136 : vector<1x8x128xf32> to vector<8x128xf32>
    %138 = vector.shape_cast %135 : vector<8x128xf32> to vector<1x8x128xf32>
    tpu.vector_store %arg11[%c4_120, %c0_121, %c0_122], %138 {strides = array<i32>} : memref<8x8x128xf32, #tpu.memory_space<vmem>>, vector<1x8x128xf32>,
    %c5_123 = arith.constant 5 : index
    %c0_124 = arith.constant 0 : index
    %c0_125 = arith.constant 0 : index
    %139 = vector.load %arg11[%c5_123, %c0_124, %c0_125] : memref<8x8x128xf32, #tpu.memory_space<vmem>>, vector<1x8x128xf32>
    %140 = vector.shape_cast %139 : vector<1x8x128xf32> to vector<8x128xf32>
    %cst_126 = arith.constant dense<0.000000e+00> : vector<8x128xf32>
    %141 = tpu.matmul %135, %84, %cst_126 {dimension_numbers = #tpu.dot_dimension_numbers<[1], [0], [0], [1], [0, 0, 1, 1], [], []>} : vector<8x128xf32>, vector<128x128xf32>, vector<8x128xf32> -> vector<8x128xf32>
    %142 = arith.addf %140, %141 : vector<8x128xf32>
    %cst_127 = arith.constant 0.000000e+00 : f32
    %143 = vector.broadcast %cst_127 : f32 to vector<8x128xf32>
    %144 = arith.maximumf %142, %143 : vector<8x128xf32>
    %c5_128 = arith.constant 5 : index
    %c0_129 = arith.constant 0 : index
    %c0_130 = arith.constant 0 : index
    %145 = vector.load %arg11[%c5_128, %c0_129, %c0_130] : memref<8x8x128xf32, #tpu.memory_space<vmem>>, vector<1x8x128xf32>
    %146 = vector.shape_cast %145 : vector<1x8x128xf32> to vector<8x128xf32>
    %147 = vector.shape_cast %144 : vector<8x128xf32> to vector<1x8x128xf32>
    tpu.vector_store %arg11[%c5_128, %c0_129, %c0_130], %147 {strides = array<i32>} : memref<8x8x128xf32, #tpu.memory_space<vmem>>, vector<1x8x128xf32>,
    %c6_131 = arith.constant 6 : index
    %c0_132 = arith.constant 0 : index
    %c0_133 = arith.constant 0 : index
    %148 = vector.load %arg11[%c6_131, %c0_132, %c0_133] : memref<8x8x128xf32, #tpu.memory_space<vmem>>, vector<1x8x128xf32>
    %149 = vector.shape_cast %148 : vector<1x8x128xf32> to vector<8x128xf32>
    %cst_134 = arith.constant dense<0.000000e+00> : vector<8x128xf32>
    %150 = tpu.matmul %144, %84, %cst_134 {dimension_numbers = #tpu.dot_dimension_numbers<[1], [0], [0], [1], [0, 0, 1, 1], [], []>} : vector<8x128xf32>, vector<128x128xf32>, vector<8x128xf32> -> vector<8x128xf32>
    %151 = arith.addf %149, %150 : vector<8x128xf32>
    %cst_135 = arith.constant 0.000000e+00 : f32
    %152 = vector.broadcast %cst_135 : f32 to vector<8x128xf32>
    %153 = arith.maximumf %151, %152 : vector<8x128xf32>
    %c6_136 = arith.constant 6 : index
    %c0_137 = arith.constant 0 : index
    %c0_138 = arith.constant 0 : index
    %154 = vector.load %arg11[%c6_136, %c0_137, %c0_138] : memref<8x8x128xf32, #tpu.memory_space<vmem>>, vector<1x8x128xf32>
    %155 = vector.shape_cast %154 : vector<1x8x128xf32> to vector<8x128xf32>
    %156 = vector.shape_cast %153 : vector<8x128xf32> to vector<1x8x128xf32>
    tpu.vector_store %arg11[%c6_136, %c0_137, %c0_138], %156 {strides = array<i32>} : memref<8x8x128xf32, #tpu.memory_space<vmem>>, vector<1x8x128xf32>,
    %c7_139 = arith.constant 7 : index
    %c0_140 = arith.constant 0 : index
    %c0_141 = arith.constant 0 : index
    %157 = vector.load %arg11[%c7_139, %c0_140, %c0_141] : memref<8x8x128xf32, #tpu.memory_space<vmem>>, vector<1x8x128xf32>
    %158 = vector.shape_cast %157 : vector<1x8x128xf32> to vector<8x128xf32>
    %cst_142 = arith.constant dense<0.000000e+00> : vector<8x128xf32>
    %159 = tpu.matmul %153, %84, %cst_142 {dimension_numbers = #tpu.dot_dimension_numbers<[1], [0], [0], [1], [0, 0, 1, 1], [], []>} : vector<8x128xf32>, vector<128x128xf32>, vector<8x128xf32> -> vector<8x128xf32>
    %160 = arith.addf %158, %159 : vector<8x128xf32>
    %cst_143 = arith.constant 0.000000e+00 : f32
    %161 = vector.broadcast %cst_143 : f32 to vector<8x128xf32>
    %162 = arith.maximumf %160, %161 : vector<8x128xf32>
    %c7_144 = arith.constant 7 : index
    %c0_145 = arith.constant 0 : index
    %c0_146 = arith.constant 0 : index
    %163 = vector.load %arg11[%c7_144, %c0_145, %c0_146] : memref<8x8x128xf32, #tpu.memory_space<vmem>>, vector<1x8x128xf32>
    %164 = vector.shape_cast %163 : vector<1x8x128xf32> to vector<8x128xf32>
    %165 = vector.shape_cast %162 : vector<8x128xf32> to vector<1x8x128xf32>
    tpu.vector_store %arg11[%c7_144, %c0_145, %c0_146], %165 {strides = array<i32>} : memref<8x8x128xf32, #tpu.memory_space<vmem>>, vector<1x8x128xf32>,
    %c0_147 = arith.constant 0 : index
    %c0_148 = arith.constant 0 : index
    %c0_149 = arith.constant 0 : index
    %166 = vector.load %arg11[%c0_147, %c0_148, %c0_149] : memref<8x8x128xf32, #tpu.memory_space<vmem>>, vector<8x8x128xf32>
    %167 = vector.shape_cast %166 : vector<8x8x128xf32> to vector<64x128xf32>
    %c0_150 = arith.constant 0 : index
    %c0_151 = arith.constant 0 : index
    %168 = vector.load %arg8[%c0_150, %c0_151] : memref<128x128xf32, #tpu.memory_space<vmem>>, vector<128x128xf32>
    %cst_152 = arith.constant dense<0.000000e+00> : vector<64x128xf32>
    %169 = tpu.matmul %167, %168, %cst_152 {dimension_numbers = #tpu.dot_dimension_numbers<[1], [0], [0], [1], [0, 0, 1, 1], [], []>} : vector<64x128xf32>, vector<128x128xf32>, vector<64x128xf32> -> vector<64x128xf32>
    %c0_153 = arith.constant 0 : index
    %c0_154 = arith.constant 0 : index
    %170 = vector.load %arg9[%c0_153, %c0_154] : memref<1x128xf32, #tpu.memory_space<vmem>>, vector<1x128xf32>
    %171 = vector.broadcast %170 : vector<1x128xf32> to vector<64x128xf32>
    %172 = arith.addf %169, %171 : vector<64x128xf32>
    %173 = vector.shape_cast %172 : vector<64x128xf32> to vector<8x8x128xf32>
    %c0_155 = arith.constant 0 : index
    %c0_156 = arith.constant 0 : index
    %c0_157 = arith.constant 0 : index
    %174 = vector.load %arg10[%c0_155, %c0_156, %c0_157] : memref<8x8x128xf32, #tpu.memory_space<vmem>>, vector<8x8x128xf32>
    tpu.vector_store %arg10[%c0_155, %c0_156, %c0_157], %173 {strides = array<i32>} : memref<8x8x128xf32, #tpu.memory_space<vmem>>, vector<8x8x128xf32>,
    return
  }
  func.func @transform_0(%arg0: i32) -> (i32, i32, i32) {
    %c0_i32 = arith.constant 0 : i32
    %c0_i32_0 = arith.constant 0 : i32
    %c0_i32_1 = arith.constant 0 : i32
    return %c0_i32, %arg0, %c0_i32_0 : i32, i32, i32
  }
  func.func @transform_1(%arg0: i32) -> (i32, i32) {
    %c0_i32 = arith.constant 0 : i32
    %c0_i32_0 = arith.constant 0 : i32
    %c0_i32_1 = arith.constant 0 : i32
    return %c0_i32, %c0_i32_0 : i32, i32
  }
  func.func @transform_2(%arg0: i32) -> (i32, i32) {
    %c0_i32 = arith.constant 0 : i32
    %c0_i32_0 = arith.constant 0 : i32
    %c0_i32_1 = arith.constant 0 : i32
    return %c0_i32, %c0_i32_0 : i32, i32
  }
  func.func @transform_3(%arg0: i32) -> (i32, i32) {
    %c0_i32 = arith.constant 0 : i32
    %c0_i32_0 = arith.constant 0 : i32
    %c0_i32_1 = arith.constant 0 : i32
    return %c0_i32, %c0_i32_0 : i32, i32
  }
  func.func @transform_4(%arg0: i32) -> (i32, i32) {
    %c0_i32 = arith.constant 0 : i32
    %c0_i32_0 = arith.constant 0 : i32
    %c0_i32_1 = arith.constant 0 : i32
    return %c0_i32, %c0_i32_0 : i32, i32
  }
  func.func @transform_5(%arg0: i32) -> (i32, i32) {
    %c0_i32 = arith.constant 0 : i32
    %c0_i32_0 = arith.constant 0 : i32
    %c0_i32_1 = arith.constant 0 : i32
    return %c0_i32, %c0_i32_0 : i32, i32
  }
  func.func @transform_6(%arg0: i32) -> (i32, i32) {
    %c0_i32 = arith.constant 0 : i32
    %c0_i32_0 = arith.constant 0 : i32
    %c0_i32_1 = arith.constant 0 : i32
    return %c0_i32, %c0_i32_0 : i32, i32
  }
  func.func @transform_7(%arg0: i32) -> (i32, i32) {
    %c0_i32 = arith.constant 0 : i32
    %c0_i32_0 = arith.constant 0 : i32
    %c0_i32_1 = arith.constant 0 : i32
    return %c0_i32, %c0_i32_0 : i32, i32
  }
  func.func @transform_8(%arg0: i32) -> (i32, i32) {
    %c0_i32 = arith.constant 0 : i32
    %c0_i32_0 = arith.constant 0 : i32
    %c0_i32_1 = arith.constant 0 : i32
    return %c0_i32, %c0_i32_0 : i32, i32
  }
  func.func @transform_9(%arg0: i32) -> (i32, i32, i32) {
    %c0_i32 = arith.constant 0 : i32
    %c0_i32_0 = arith.constant 0 : i32
    %c0_i32_1 = arith.constant 0 : i32
    return %c0_i32, %arg0, %c0_i32_0 : i32, i32, i32
  }
}

</mosaic_0001>

<llo_original>
// kernel: character_rnn_forward.1
$region0: #{character_rnn_forward.1}
  #allocation0 [shape = 'u32[]', space=smem, size = 0x4, offset = 0x4, fixed_abs, tag = 'smem constant byte address 0x4 - core index']
  #allocation1 [shape = 'u32[72,128]{1,0:T(1,128)}', space=vmem, size = 0x9000, scoped, tag = 'internal scratch']
  #allocation2 [shape = 'f32[8,8,128]{2,1,0:T(8,128)}', space=vmem, size = 0x8000, scoped, tag = 'scratch operand']
  %s0 = inlined_call_operand.vmem [shape: f32[8,8,128], index: 0, kind: input, shape index: {}]
  %s1 = inlined_call_operand.hbm [shape: f32[128,128], index: 1, kind: input, shape index: {}]
  %s2 = inlined_call_operand.hbm [shape: f32[128,128], index: 2, kind: input, shape index: {}]
  %s3 = inlined_call_operand.vmem [shape: f32[1,128], index: 3, kind: input, shape index: {}]
  %s4 = inlined_call_operand.hbm [shape: f32[128,128], index: 4, kind: input, shape index: {}]
  %s5 = inlined_call_operand.hbm [shape: f32[128,128], index: 5, kind: input, shape index: {}]
  %s6 = inlined_call_operand.vmem [shape: f32[1,128], index: 6, kind: input, shape index: {}]
  %s7 = inlined_call_operand.hbm [shape: f32[128,128], index: 7, kind: input, shape index: {}]
  %s8 = inlined_call_operand.vmem [shape: f32[1,128], index: 8, kind: input, shape index: {}]
  %s9 = inlined_call_operand.vmem [shape: f32[8,8,128], index: 9, kind: output, shape index: {}]
  %s10 = sld [smem:[#allocation0]]
  $region66: #{character_rnn_forward.1} parent=0
    _
  %s12 = ssub.s32 1, %s10
  %s13 = scalar_select 0, %s12, %s10
  $region1: #{character_rnn_forward.1} parent=0
    #allocation3 [shape = 'u8[65536]{0}', space=vmem, size = 0x10000, scoped, tag = 'input window, operand 1, single buffered']
    #allocation4 [shape = 's32[1]{0}', space=sflag, size = 0x4, scoped, tag = 'scoped memory for character_rnn_forward.1']
    #allocation5 [shape = 'u8[65536]{0}', space=vmem, size = 0x10000, scoped, tag = 'input window, operand 2, single buffered']
    #allocation6 [shape = 's32[1]{0}', space=sflag, size = 0x4, scoped, tag = 'scoped memory for character_rnn_forward.1']
    #allocation7 [shape = 'u8[65536]{0}', space=vmem, size = 0x10000, scoped, tag = 'input window, operand 4, single buffered']
    #allocation8 [shape = 'u8[65536]{0}', space=vmem, size = 0x10000, scoped, tag = 'input window, operand 5, single buffered']
    #allocation9 [shape = 's32[1]{0}', space=sflag, size = 0x4, scoped, tag = 'scoped memory for character_rnn_forward.1']
    #allocation10 [shape = 'u8[65536]{0}', space=vmem, size = 0x10000, scoped, tag = 'input window, operand 7, single buffered']
    %14 = vsyncpa [#allocation4], 0
    %15 = vsyncpa [#allocation6], 0
    %16 = vsyncpa [#allocation9], 0
    // Predicated region
    $region2: #{character_rnn_forward.1} parent=1 // pred_check
      _
    $region3: #{character_rnn_forward.1} parent=1 // pred_check_branch
      %18 = sbr.rel (0) target = $region5
    $region4: #{character_rnn_forward.1} parent=1 // pred_region
      _
    $region5: #{character_rnn_forward.1} parent=1 // pred_fallthru
      _
    // Predicated region
    $region6: #{character_rnn_forward.1} parent=1 // pred_check
      _
    $region7: #{character_rnn_forward.1} parent=1 // pred_check_branch
      %20 = sbr.rel (0) target = $region9
    $region8: #{character_rnn_forward.1} parent=1 // pred_region
      %22 = vsyncadd [#allocation4], 0
      %s23 = sshll.u32 %s1, 4
      %s24 = int_to_ptr.hbm [resolvable:$true] %s23
      %s25 = sshll.u32 [#allocation3], 4
      %s26 = int_to_ptr.vmem [resolvable:$true] %s25
      %31 = dma.hbm_to_vmem [thread:$0]  %s24, 2048, %s26, [#allocation4], 128, 128, 8
    $region9: #{character_rnn_forward.1} parent=1 // pred_fallthru
      _
    // Predicated region
    $region10: #{character_rnn_forward.1} parent=1 // pred_check
      _
    $region11: #{character_rnn_forward.1} parent=1 // pred_check_branch
      %33 = sbr.rel (0) target = $region13
    $region12: #{character_rnn_forward.1} parent=1 // pred_region
      %35 = vsyncadd [#allocation6], 0
      %s36 = sshll.u32 %s2, 4
      %s37 = int_to_ptr.hbm [resolvable:$true] %s36
      %s38 = sshll.u32 [#allocation5], 4
      %s39 = int_to_ptr.vmem [resolvable:$true] %s38
      %44 = dma.hbm_to_vmem [thread:$0]  %s37, 2048, %s39, [#allocation6], 128, 128, 8
    $region13: #{character_rnn_forward.1} parent=1 // pred_fallthru
      _
    // Predicated region
    $region14: #{character_rnn_forward.1} parent=1 // pred_check
      _
    $region15: #{character_rnn_forward.1} parent=1 // pred_check_branch
      %46 = sbr.rel (0) target = $region17
    $region16: #{character_rnn_forward.1} parent=1 // pred_region
      _
    $region17: #{character_rnn_forward.1} parent=1 // pred_fallthru
      _
    // Predicated region
    $region18: #{character_rnn_forward.1} parent=1 // pred_check
      _
    $region19: #{character_rnn_forward.1} parent=1 // pred_check_branch
      %48 = sbr.rel (0) target = $region21
    $region20: #{character_rnn_forward.1} parent=1 // pred_region
      %50 = vsyncadd [#allocation6], 0
      %s51 = sshll.u32 %s4, 4
      %s52 = int_to_ptr.hbm [resolvable:$true] %s51
      %s53 = sshll.u32 [#allocation7], 4
      %s54 = int_to_ptr.vmem [resolvable:$true] %s53
      %59 = dma.hbm_to_vmem [thread:$0]  %s52, 2048, %s54, [#allocation6], 128, 128, 8
    $region21: #{character_rnn_forward.1} parent=1 // pred_fallthru
      _
    // Predicated region
    $region22: #{character_rnn_forward.1} parent=1 // pred_check
      _
    $region23: #{character_rnn_forward.1} parent=1 // pred_check_branch
      %61 = sbr.rel (0) target = $region25
    $region24: #{character_rnn_forward.1} parent=1 // pred_region
      %63 = vsyncadd [#allocation9], 0
      %s64 = sshll.u32 %s5, 4
      %s65 = int_to_ptr.hbm [resolvable:$true] %s64
      %s66 = sshll.u32 [#allocation8], 4
      %s67 = int_to_ptr.vmem [resolvable:$true] %s66
      %72 = dma.hbm_to_vmem [thread:$0]  %s65, 2048, %s67, [#allocation9], 128, 128, 8
    $region25: #{character_rnn_forward.1} parent=1 // pred_fallthru
      _
    // Predicated region
    $region26: #{character_rnn_forward.1} parent=1 // pred_check
      _
    $region27: #{character_rnn_forward.1} parent=1 // pred_check_branch
      %74 = sbr.rel (0) target = $region29
    $region28: #{character_rnn_forward.1} parent=1 // pred_region
      _
    $region29: #{character_rnn_forward.1} parent=1 // pred_fallthru
      _
    // Predicated region
    $region30: #{character_rnn_forward.1} parent=1 // pred_check
      _
    $region31: #{character_rnn_forward.1} parent=1 // pred_check_branch
      %76 = sbr.rel (0) target = $region33
    $region32: #{character_rnn_forward.1} parent=1 // pred_region
      %78 = vsyncadd [#allocation9], 0
      %s79 = sshll.u32 %s7, 4
      %s80 = int_to_ptr.hbm [resolvable:$true] %s79
      %s81 = sshll.u32 [#allocation10], 4
      %s82 = int_to_ptr.vmem [resolvable:$true] %s81
      %87 = dma.hbm_to_vmem [thread:$0]  %s80, 2048, %s82, [#allocation9], 128, 128, 8
    $region33: #{character_rnn_forward.1} parent=1 // pred_fallthru
      _
    // Predicated region
    $region34: #{character_rnn_forward.1} parent=1 // pred_check
      _
    $region35: #{character_rnn_forward.1} parent=1 // pred_check_branch
      %89 = sbr.rel (0) target = $region37
    $region36: #{character_rnn_forward.1} parent=1 // pred_region
      _
    $region37: #{character_rnn_forward.1} parent=1 // pred_fallthru
      _
    // Predicated region
    $region38: #{character_rnn_forward.1} parent=1 // pred_check
      _
    $region39: #{character_rnn_forward.1} parent=1 // pred_check_branch
      %91 = sbr.rel (0) target = $region41
    $region40: #{character_rnn_forward.1} parent=1 // pred_region
      %93 = dma.done [#allocation4], 2048
    $region41: #{character_rnn_forward.1} parent=1 // pred_fallthru
      _
    // Predicated region
    $region42: #{character_rnn_forward.1} parent=1 // pred_check
      _
    $region43: #{character_rnn_forward.1} parent=1 // pred_check_branch
      %95 = sbr.rel (0) target = $region45
    $region44: #{character_rnn_forward.1} parent=1 // pred_region
      %97 = dma.done [#allocation6], 2048
    $region45: #{character_rnn_forward.1} parent=1 // pred_fallthru
      _
    // Predicated region
    $region46: #{character_rnn_forward.1} parent=1 // pred_check
      _
    $region47: #{character_rnn_forward.1} parent=1 // pred_check_branch
      %99 = sbr.rel (0) target = $region49
    $region48: #{character_rnn_forward.1} parent=1 // pred_region
      %101 = dma.done [#allocation6], 2048
    $region49: #{character_rnn_forward.1} parent=1 // pred_fallthru
      _
    // Predicated region
    $region50: #{character_rnn_forward.1} parent=1 // pred_check
      _
    $region51: #{character_rnn_forward.1} parent=1 // pred_check_branch
      %103 = sbr.rel (0) target = $region53
    $region52: #{character_rnn_forward.1} parent=1 // pred_region
      %105 = dma.done [#allocation9], 2048
    $region53: #{character_rnn_forward.1} parent=1 // pred_fallthru
      _
    // Predicated region
    $region54: #{character_rnn_forward.1} parent=1 // pred_check
      _
    $region55: #{character_rnn_forward.1} parent=1 // pred_check_branch
      %107 = sbr.rel (0) target = $region57
    $region56: #{character_rnn_forward.1} parent=1 // pred_region
      %109 = dma.done [#allocation9], 2048
    $region57: #{character_rnn_forward.1} parent=1 // pred_fallthru
      _
    %v110 = vld [vmem:[#allocation3] sm:$0xff]
    %v111 = vld [vmem:[#allocation3 + $0x8] sm:$0xff]
    %v112 = vld [vmem:[#allocation3 + $0x10] sm:$0xff]
    %v113 = vld [vmem:[#allocation3 + $0x18] sm:$0xff]
    %v114 = vld [vmem:[#allocation3 + $0x20] sm:$0xff]
    %v115 = vld [vmem:[#allocation3 + $0x28] sm:$0xff]
    %v116 = vld [vmem:[#allocation3 + $0x30] sm:$0xff]
    %v117 = vld [vmem:[#allocation3 + $0x38] sm:$0xff]
    %v118 = vld [vmem:[#allocation3 + $0x40] sm:$0xff]
    %v119 = vld [vmem:[#allocation3 + $0x48] sm:$0xff]
    %v120 = vld [vmem:[#allocation3 + $0x50] sm:$0xff]
    %v121 = vld [vmem:[#allocation3 + $0x58] sm:$0xff]
    %v122 = vld [vmem:[#allocation3 + $0x60] sm:$0xff]
    %v123 = vld [vmem:[#allocation3 + $0x68] sm:$0xff]
    %v124 = vld [vmem:[#allocation3 + $0x70] sm:$0xff]
    %v125 = vld [vmem:[#allocation3 + $0x78] sm:$0xff]
    %v126 = vld [vmem:[#allocation5] sm:$0xff]
    %v127 = vld [vmem:[#allocation5 + $0x8] sm:$0xff]
    %v128 = vld [vmem:[#allocation5 + $0x10] sm:$0xff]
    %v129 = vld [vmem:[#allocation5 + $0x18] sm:$0xff]
    %v130 = vld [vmem:[#allocation5 + $0x20] sm:$0xff]
    %v131 = vld [vmem:[#allocation5 + $0x28] sm:$0xff]
    %v132 = vld [vmem:[#allocation5 + $0x30] sm:$0xff]
    %v133 = vld [vmem:[#allocation5 + $0x38] sm:$0xff]
    %v134 = vld [vmem:[#allocation5 + $0x40] sm:$0xff]
    %v135 = vld [vmem:[#allocation5 + $0x48] sm:$0xff]
    %v136 = vld [vmem:[#allocation5 + $0x50] sm:$0xff]
    %v137 = vld [vmem:[#allocation5 + $0x58] sm:$0xff]
    %v138 = vld [vmem:[#allocation5 + $0x60] sm:$0xff]
    %v139 = vld [vmem:[#allocation5 + $0x68] sm:$0xff]
    %v140 = vld [vmem:[#allocation5 + $0x70] sm:$0xff]
    %v141 = vld [vmem:[#allocation5 + $0x78] sm:$0xff]
    %v142 = vld [vmem:[%s3] sm:$0x1]
    %v143 = vld [vmem:[%s0] sm:$0xff]
    %v144 = vld [vmem:[%s0 + $0x8] sm:$0xff]
    %v145 = vld [vmem:[%s0 + $0x10] sm:$0xff]
    %v146 = vld [vmem:[%s0 + $0x18] sm:$0xff]
    %v147 = vld [vmem:[%s0 + $0x20] sm:$0xff]
    %v148 = vld [vmem:[%s0 + $0x28] sm:$0xff]
    %v149 = vld [vmem:[%s0 + $0x30] sm:$0xff]
    %v150 = vld [vmem:[%s0 + $0x38] sm:$0xff]
    %v152 = vperm.slane %v142, 0
    %154 = vmatpush.msra.mxu0 %v125
    %155 = vmatpush.msra.mxu0 %v124
    %156 = vmatpush.msra.mxu0 %v123
    %157 = vmatpush.msra.mxu0 %v122
    %158 = vmatpush.msra.mxu0 %v121
    %159 = vmatpush.msra.mxu0 %v120
    %160 = vmatpush.msra.mxu0 %v119
    %161 = vmatpush.msra.mxu0 %v118
    %162 = vmatpush.msra.mxu0 %v117
    %163 = vmatpush.msra.mxu0 %v116
    %164 = vmatpush.msra.mxu0 %v115
    %165 = vmatpush.msra.mxu0 %v114
    %166 = vmatpush.msra.mxu0 %v113
    %167 = vmatpush.msra.mxu0 %v112
    %168 = vmatpush.msra.mxu0 %v111
    %169 = vmatpush.msra.mxu0 %v110
    %170 = vmatmul.f32.gmra.mxu0 %v143
    %v171 = vpop.f32.mrf.mxu0
    %v172 = vadd.f32 %v152, %v171
    %173 = vmatmul.f32.gmra.mxu0 %v144
    %v174 = vpop.f32.mrf.mxu0
    %v175 = vadd.f32 %v152, %v174
    %176 = vmatmul.f32.gmra.mxu0 %v145
    %v177 = vpop.f32.mrf.mxu0
    %v178 = vadd.f32 %v152, %v177
    %179 = vmatmul.f32.gmra.mxu0 %v146
    %v180 = vpop.f32.mrf.mxu0
    %v181 = vadd.f32 %v152, %v180
    %182 = vmatmul.f32.gmra.mxu0 %v147
    %v183 = vpop.f32.mrf.mxu0
    %v184 = vadd.f32 %v152, %v183
    %185 = vmatmul.f32.gmra.mxu0 %v148
    %v186 = vpop.f32.mrf.mxu0
    %v187 = vadd.f32 %v152, %v186
    %188 = vmatmul.f32.gmra.mxu0 %v149
    %v189 = vpop.f32.mrf.mxu0
    %v190 = vadd.f32 %v152, %v189
    %191 = vmatmul.f32.gmra.mxu0 %v150
    %v192 = vpop.f32.mrf.mxu0
    %v193 = vadd.f32 %v152, %v192
    %194 = vdwg.mxu0
    %195 = vst [vmem:[#allocation2] sm:$0xff] %v172
    %196 = vst [vmem:[#allocation2 + $0x8] sm:$0xff] %v175
    %197 = vst [vmem:[#allocation2 + $0x10] sm:$0xff] %v178
    %198 = vst [vmem:[#allocation2 + $0x18] sm:$0xff] %v181
    %199 = vst [vmem:[#allocation2 + $0x20] sm:$0xff] %v184
    %200 = vst [vmem:[#allocation2 + $0x28] sm:$0xff] %v187
    %201 = vst [vmem:[#allocation2 + $0x30] sm:$0xff] %v190
    %202 = vst [vmem:[#allocation2 + $0x38] sm:$0xff] %v193
    %v203 = vld [vmem:[#allocation2] sm:$0xff]
    %204 = vmatpush.msra.mxu0 %v141
    %205 = vmatpush.msra.mxu0 %v140
    %206 = vmatpush.msra.mxu0 %v139
    %207 = vmatpush.msra.mxu0 %v138
    %208 = vmatpush.msra.mxu0 %v137
    %209 = vmatpush.msra.mxu0 %v136
    %210 = vmatpush.msra.mxu0 %v135
    %211 = vmatpush.msra.mxu0 %v134
    %212 = vmatpush.msra.mxu0 %v133
    %213 = vmatpush.msra.mxu0 %v132
    %214 = vmatpush.msra.mxu0 %v131
    %215 = vmatpush.msra.mxu0 %v130
    %216 = vmatpush.msra.mxu0 %v129
    %217 = vmatpush.msra.mxu0 %v128
    %218 = vmatpush.msra.mxu0 %v127
    %219 = vmatpush.msra.mxu0 %v126
    %220 = vmatmul.f32.gmra.mxu0 0.0
    %v221 = vpop.f32.mrf.mxu0
    %v222 = vadd.f32 0.0, %v221
    %223 = vdwg.mxu0
    %v224 = vadd.f32 %v203, %v222
    %v225 = vmax.f32 %v224, 0.0
    %226 = vst [vmem:[#allocation2] sm:$0xff] %v225
    %s227 = scalar_lea.vmem [#allocation2], 8
    %v228 = vld [vmem:[%s227] sm:$0xff]
    %229 = vmatpush.msra.mxu0 %v141
    %230 = vmatpush.msra.mxu0 %v140
    %231 = vmatpush.msra.mxu0 %v139
    %232 = vmatpush.msra.mxu0 %v138
    %233 = vmatpush.msra.mxu0 %v137
    %234 = vmatpush.msra.mxu0 %v136
    %235 = vmatpush.msra.mxu0 %v135
    %236 = vmatpush.msra.mxu0 %v134
    %237 = vmatpush.msra.mxu0 %v133
    %238 = vmatpush.msra.mxu0 %v132
    %239 = vmatpush.msra.mxu0 %v131
    %240 = vmatpush.msra.mxu0 %v130
    %241 = vmatpush.msra.mxu0 %v129
    %242 = vmatpush.msra.mxu0 %v128
    %243 = vmatpush.msra.mxu0 %v127
    %244 = vmatpush.msra.mxu0 %v126
    %245 = vmatmul.f32.gmra.mxu0 %v225
    %v246 = vpop.f32.mrf.mxu0
    %v247 = vadd.f32 0.0, %v246
    %248 = vdwg.mxu0
    %v249 = vadd.f32 %v228, %v247
    %v250 = vmax.f32 %v249, 0.0
    %251 = vst [vmem:[%s227] sm:$0xff] %v250
    %s252 = scalar_lea.vmem [#allocation2], 16
    %v253 = vld [vmem:[%s252] sm:$0xff]
    %254 = vmatpush.msra.mxu0 %v141
    %255 = vmatpush.msra.mxu0 %v140
    %256 = vmatpush.msra.mxu0 %v139
    %257 = vmatpush.msra.mxu0 %v138
    %258 = vmatpush.msra.mxu0 %v137
    %259 = vmatpush.msra.mxu0 %v136
    %260 = vmatpush.msra.mxu0 %v135
    %261 = vmatpush.msra.mxu0 %v134
    %262 = vmatpush.msra.mxu0 %v133
    %263 = vmatpush.msra.mxu0 %v132
    %264 = vmatpush.msra.mxu0 %v131
    %265 = vmatpush.msra.mxu0 %v130
    %266 = vmatpush.msra.mxu0 %v129
    %267 = vmatpush.msra.mxu0 %v128
    %268 = vmatpush.msra.mxu0 %v127
    %269 = vmatpush.msra.mxu0 %v126
    %270 = vmatmul.f32.gmra.mxu0 %v250
    %v271 = vpop.f32.mrf.mxu0
    %v272 = vadd.f32 0.0, %v271
    %273 = vdwg.mxu0
    %v274 = vadd.f32 %v253, %v272
    %v275 = vmax.f32 %v274, 0.0
    %276 = vst [vmem:[%s252] sm:$0xff] %v275
    %s277 = scalar_lea.vmem [#allocation2], 24
    %v278 = vld [vmem:[%s277] sm:$0xff]
    %279 = vmatpush.msra.mxu0 %v141
    %280 = vmatpush.msra.mxu0 %v140
    %281 = vmatpush.msra.mxu0 %v139
    %282 = vmatpush.msra.mxu0 %v138
    %283 = vmatpush.msra.mxu0 %v137
    %284 = vmatpush.msra.mxu0 %v136
    %285 = vmatpush.msra.mxu0 %v135
    %286 = vmatpush.msra.mxu0 %v134
    %287 = vmatpush.msra.mxu0 %v133
    %288 = vmatpush.msra.mxu0 %v132
    %289 = vmatpush.msra.mxu0 %v131
    %290 = vmatpush.msra.mxu0 %v130
    %291 = vmatpush.msra.mxu0 %v129
    %292 = vmatpush.msra.mxu0 %v128
    %293 = vmatpush.msra.mxu0 %v127
    %294 = vmatpush.msra.mxu0 %v126
    %295 = vmatmul.f32.gmra.mxu0 %v275
    %v296 = vpop.f32.mrf.mxu0
    %v297 = vadd.f32 0.0, %v296
    %298 = vdwg.mxu0
    %v299 = vadd.f32 %v278, %v297
    %v300 = vmax.f32 %v299, 0.0
    %301 = vst [vmem:[%s277] sm:$0xff] %v300
    %s302 = scalar_lea.vmem [#allocation2], 32
    %v303 = vld [vmem:[%s302] sm:$0xff]
    %304 = vmatpush.msra.mxu0 %v141
    %305 = vmatpush.msra.mxu0 %v140
    %306 = vmatpush.msra.mxu0 %v139
    %307 = vmatpush.msra.mxu0 %v138
    %308 = vmatpush.msra.mxu0 %v137
    %309 = vmatpush.msra.mxu0 %v136
    %310 = vmatpush.msra.mxu0 %v135
    %311 = vmatpush.msra.mxu0 %v134
    %312 = vmatpush.msra.mxu0 %v133
    %313 = vmatpush.msra.mxu0 %v132
    %314 = vmatpush.msra.mxu0 %v131
    %315 = vmatpush.msra.mxu0 %v130
    %316 = vmatpush.msra.mxu0 %v129
    %317 = vmatpush.msra.mxu0 %v128
    %318 = vmatpush.msra.mxu0 %v127
    %319 = vmatpush.msra.mxu0 %v126
    %320 = vmatmul.f32.gmra.mxu0 %v300
    %v321 = vpop.f32.mrf.mxu0
    %v322 = vadd.f32 0.0, %v321
    %323 = vdwg.mxu0
    %v324 = vadd.f32 %v303, %v322
    %v325 = vmax.f32 %v324, 0.0
    %326 = vst [vmem:[%s302] sm:$0xff] %v325
    %s327 = scalar_lea.vmem [#allocation2], 40
    %v328 = vld [vmem:[%s327] sm:$0xff]
    %329 = vmatpush.msra.mxu0 %v141
    %330 = vmatpush.msra.mxu0 %v140
    %331 = vmatpush.msra.mxu0 %v139
    %332 = vmatpush.msra.mxu0 %v138
    %333 = vmatpush.msra.mxu0 %v137
    %334 = vmatpush.msra.mxu0 %v136
    %335 = vmatpush.msra.mxu0 %v135
    %336 = vmatpush.msra.mxu0 %v134
    %337 = vmatpush.msra.mxu0 %v133
    %338 = vmatpush.msra.mxu0 %v132
    %339 = vmatpush.msra.mxu0 %v131
    %340 = vmatpush.msra.mxu0 %v130
    %341 = vmatpush.msra.mxu0 %v129
    %342 = vmatpush.msra.mxu0 %v128
    %343 = vmatpush.msra.mxu0 %v127
    %344 = vmatpush.msra.mxu0 %v126
    %345 = vmatmul.f32.gmra.mxu0 %v325
    %v346 = vpop.f32.mrf.mxu0
    %v347 = vadd.f32 0.0, %v346
    %348 = vdwg.mxu0
    %v349 = vadd.f32 %v328, %v347
    %v350 = vmax.f32 %v349, 0.0
    %351 = vst [vmem:[%s327] sm:$0xff] %v350
    %s352 = scalar_lea.vmem [#allocation2], 48
    %v353 = vld [vmem:[%s352] sm:$0xff]
    %354 = vmatpush.msra.mxu0 %v141
    %355 = vmatpush.msra.mxu0 %v140
    %356 = vmatpush.msra.mxu0 %v139
    %357 = vmatpush.msra.mxu0 %v138
    %358 = vmatpush.msra.mxu0 %v137
    %359 = vmatpush.msra.mxu0 %v136
    %360 = vmatpush.msra.mxu0 %v135
    %361 = vmatpush.msra.mxu0 %v134
    %362 = vmatpush.msra.mxu0 %v133
    %363 = vmatpush.msra.mxu0 %v132
    %364 = vmatpush.msra.mxu0 %v131
    %365 = vmatpush.msra.mxu0 %v130
    %366 = vmatpush.msra.mxu0 %v129
    %367 = vmatpush.msra.mxu0 %v128
    %368 = vmatpush.msra.mxu0 %v127
    %369 = vmatpush.msra.mxu0 %v126
    %370 = vmatmul.f32.gmra.mxu0 %v350
    %v371 = vpop.f32.mrf.mxu0
    %v372 = vadd.f32 0.0, %v371
    %373 = vdwg.mxu0
    %v374 = vadd.f32 %v353, %v372
    %v375 = vmax.f32 %v374, 0.0
    %376 = vst [vmem:[%s352] sm:$0xff] %v375
    %s377 = scalar_lea.vmem [#allocation2], 56
    %v378 = vld [vmem:[%s377] sm:$0xff]
    %379 = vmatpush.msra.mxu0 %v141
    %380 = vmatpush.msra.mxu0 %v140
    %381 = vmatpush.msra.mxu0 %v139
    %382 = vmatpush.msra.mxu0 %v138
    %383 = vmatpush.msra.mxu0 %v137
    %384 = vmatpush.msra.mxu0 %v136
    %385 = vmatpush.msra.mxu0 %v135
    %386 = vmatpush.msra.mxu0 %v134
    %387 = vmatpush.msra.mxu0 %v133
    %388 = vmatpush.msra.mxu0 %v132
    %389 = vmatpush.msra.mxu0 %v131
    %390 = vmatpush.msra.mxu0 %v130
    %391 = vmatpush.msra.mxu0 %v129
    %392 = vmatpush.msra.mxu0 %v128
    %393 = vmatpush.msra.mxu0 %v127
    %394 = vmatpush.msra.mxu0 %v126
    %395 = vmatmul.f32.gmra.mxu0 %v375
    %v396 = vpop.f32.mrf.mxu0
    %v397 = vadd.f32 0.0, %v396
    %398 = vdwg.mxu0
    %v399 = vadd.f32 %v378, %v397
    %v400 = vmax.f32 %v399, 0.0
    %401 = vst [vmem:[%s377] sm:$0xff] %v400
    %v402 = vld [vmem:[#allocation7] sm:$0xff]
    %v403 = vld [vmem:[#allocation7 + $0x8] sm:$0xff]
    %v404 = vld [vmem:[#allocation7 + $0x10] sm:$0xff]
    %v405 = vld [vmem:[#allocation7 + $0x18] sm:$0xff]
    %v406 = vld [vmem:[#allocation7 + $0x20] sm:$0xff]
    %v407 = vld [vmem:[#allocation7 + $0x28] sm:$0xff]
    %v408 = vld [vmem:[#allocation7 + $0x30] sm:$0xff]
    %v409 = vld [vmem:[#allocation7 + $0x38] sm:$0xff]
    %v410 = vld [vmem:[#allocation7 + $0x40] sm:$0xff]
    %v411 = vld [vmem:[#allocation7 + $0x48] sm:$0xff]
    %v412 = vld [vmem:[#allocation7 + $0x50] sm:$0xff]
    %v413 = vld [vmem:[#allocation7 + $0x58] sm:$0xff]
    %v414 = vld [vmem:[#allocation7 + $0x60] sm:$0xff]
    %v415 = vld [vmem:[#allocation7 + $0x68] sm:$0xff]
    %v416 = vld [vmem:[#allocation7 + $0x70] sm:$0xff]
    %v417 = vld [vmem:[#allocation7 + $0x78] sm:$0xff]
    %v418 = vld [vmem:[#allocation8] sm:$0xff]
    %v419 = vld [vmem:[#allocation8 + $0x8] sm:$0xff]
    %v420 = vld [vmem:[#allocation8 + $0x10] sm:$0xff]
    %v421 = vld [vmem:[#allocation8 + $0x18] sm:$0xff]
    %v422 = vld [vmem:[#allocation8 + $0x20] sm:$0xff]
    %v423 = vld [vmem:[#allocation8 + $0x28] sm:$0xff]
    %v424 = vld [vmem:[#allocation8 + $0x30] sm:$0xff]
    %v425 = vld [vmem:[#allocation8 + $0x38] sm:$0xff]
    %v426 = vld [vmem:[#allocation8 + $0x40] sm:$0xff]
    %v427 = vld [vmem:[#allocation8 + $0x48] sm:$0xff]
    %v428 = vld [vmem:[#allocation8 + $0x50] sm:$0xff]
    %v429 = vld [vmem:[#allocation8 + $0x58] sm:$0xff]
    %v430 = vld [vmem:[#allocation8 + $0x60] sm:$0xff]
    %v431 = vld [vmem:[#allocation8 + $0x68] sm:$0xff]
    %v432 = vld [vmem:[#allocation8 + $0x70] sm:$0xff]
    %v433 = vld [vmem:[#allocation8 + $0x78] sm:$0xff]
    %v434 = vld [vmem:[%s6] sm:$0x1]
    %v435 = vld [vmem:[#allocation2] sm:$0xff]
    %v436 = vld [vmem:[#allocation2 + $0x8] sm:$0xff]
    %v437 = vld [vmem:[#allocation2 + $0x10] sm:$0xff]
    %v438 = vld [vmem:[#allocation2 + $0x18] sm:$0xff]
    %v439 = vld [vmem:[#allocation2 + $0x20] sm:$0xff]
    %v440 = vld [vmem:[#allocation2 + $0x28] sm:$0xff]
    %v441 = vld [vmem:[#allocation2 + $0x30] sm:$0xff]
    %v442 = vld [vmem:[#allocation2 + $0x38] sm:$0xff]
    %v444 = vperm.slane %v434, 0
    %446 = vmatpush.msra.mxu0 %v417
    %447 = vmatpush.msra.mxu0 %v416
    %448 = vmatpush.msra.mxu0 %v415
    %449 = vmatpush.msra.mxu0 %v414
    %450 = vmatpush.msra.mxu0 %v413
    %451 = vmatpush.msra.mxu0 %v412
    %452 = vmatpush.msra.mxu0 %v411
    %453 = vmatpush.msra.mxu0 %v410
    %454 = vmatpush.msra.mxu0 %v409
    %455 = vmatpush.msra.mxu0 %v408
    %456 = vmatpush.msra.mxu0 %v407
    %457 = vmatpush.msra.mxu0 %v406
    %458 = vmatpush.msra.mxu0 %v405
    %459 = vmatpush.msra.mxu0 %v404
    %460 = vmatpush.msra.mxu0 %v403
    %461 = vmatpush.msra.mxu0 %v402
    %462 = vmatmul.f32.gmra.mxu0 %v435
    %v463 = vpop.f32.mrf.mxu0
    %v464 = vadd.f32 %v444, %v463
    %465 = vmatmul.f32.gmra.mxu0 %v436
    %v466 = vpop.f32.mrf.mxu0
    %v467 = vadd.f32 %v444, %v466
    %468 = vmatmul.f32.gmra.mxu0 %v437
    %v469 = vpop.f32.mrf.mxu0
    %v470 = vadd.f32 %v444, %v469
    %471 = vmatmul.f32.gmra.mxu0 %v438
    %v472 = vpop.f32.mrf.mxu0
    %v473 = vadd.f32 %v444, %v472
    %474 = vmatmul.f32.gmra.mxu0 %v439
    %v475 = vpop.f32.mrf.mxu0
    %v476 = vadd.f32 %v444, %v475
    %477 = vmatmul.f32.gmra.mxu0 %v440
    %v478 = vpop.f32.mrf.mxu0
    %v479 = vadd.f32 %v444, %v478
    %480 = vmatmul.f32.gmra.mxu0 %v441
    %v481 = vpop.f32.mrf.mxu0
    %v482 = vadd.f32 %v444, %v481
    %483 = vmatmul.f32.gmra.mxu0 %v442
    %v484 = vpop.f32.mrf.mxu0
    %v485 = vadd.f32 %v444, %v484
    %486 = vdwg.mxu0
    %487 = vst [vmem:[#allocation2] sm:$0xff] %v464
    %488 = vst [vmem:[#allocation2 + $0x8] sm:$0xff] %v467
    %489 = vst [vmem:[#allocation2 + $0x10] sm:$0xff] %v470
    %490 = vst [vmem:[#allocation2 + $0x18] sm:$0xff] %v473
    %491 = vst [vmem:[#allocation2 + $0x20] sm:$0xff] %v476
    %492 = vst [vmem:[#allocation2 + $0x28] sm:$0xff] %v479
    %493 = vst [vmem:[#allocation2 + $0x30] sm:$0xff] %v482
    %494 = vst [vmem:[#allocation2 + $0x38] sm:$0xff] %v485
    %v495 = vld [vmem:[#allocation2] sm:$0xff]
    %496 = vmatpush.msra.mxu0 %v433
    %497 = vmatpush.msra.mxu0 %v432
    %498 = vmatpush.msra.mxu0 %v431
    %499 = vmatpush.msra.mxu0 %v430
    %500 = vmatpush.msra.mxu0 %v429
    %501 = vmatpush.msra.mxu0 %v428
    %502 = vmatpush.msra.mxu0 %v427
    %503 = vmatpush.msra.mxu0 %v426
    %504 = vmatpush.msra.mxu0 %v425
    %505 = vmatpush.msra.mxu0 %v424
    %506 = vmatpush.msra.mxu0 %v423
    %507 = vmatpush.msra.mxu0 %v422
    %508 = vmatpush.msra.mxu0 %v421
    %509 = vmatpush.msra.mxu0 %v420
    %510 = vmatpush.msra.mxu0 %v419
    %511 = vmatpush.msra.mxu0 %v418
    %512 = vmatmul.f32.gmra.mxu0 0.0
    %v513 = vpop.f32.mrf.mxu0
    %v514 = vadd.f32 0.0, %v513
    %515 = vdwg.mxu0
    %v516 = vadd.f32 %v495, %v514
    %v517 = vmax.f32 %v516, 0.0
    %518 = vst [vmem:[#allocation2] sm:$0xff] %v517
    %v519 = vld [vmem:[%s227] sm:$0xff]
    %520 = vmatpush.msra.mxu0 %v433
    %521 = vmatpush.msra.mxu0 %v432
    %522 = vmatpush.msra.mxu0 %v431
    %523 = vmatpush.msra.mxu0 %v430
    %524 = vmatpush.msra.mxu0 %v429
    %525 = vmatpush.msra.mxu0 %v428
    %526 = vmatpush.msra.mxu0 %v427
    %527 = vmatpush.msra.mxu0 %v426
    %528 = vmatpush.msra.mxu0 %v425
    %529 = vmatpush.msra.mxu0 %v424
    %530 = vmatpush.msra.mxu0 %v423
    %531 = vmatpush.msra.mxu0 %v422
    %532 = vmatpush.msra.mxu0 %v421
    %533 = vmatpush.msra.mxu0 %v420
    %534 = vmatpush.msra.mxu0 %v419
    %535 = vmatpush.msra.mxu0 %v418
    %536 = vmatmul.f32.gmra.mxu0 %v517
    %v537 = vpop.f32.mrf.mxu0
    %v538 = vadd.f32 0.0, %v537
    %539 = vdwg.mxu0
    %v540 = vadd.f32 %v519, %v538
    %v541 = vmax.f32 %v540, 0.0
    %542 = vst [vmem:[%s227] sm:$0xff] %v541
    %v543 = vld [vmem:[%s252] sm:$0xff]
    %544 = vmatpush.msra.mxu0 %v433
    %545 = vmatpush.msra.mxu0 %v432
    %546 = vmatpush.msra.mxu0 %v431
    %547 = vmatpush.msra.mxu0 %v430
    %548 = vmatpush.msra.mxu0 %v429
    %549 = vmatpush.msra.mxu0 %v428
    %550 = vmatpush.msra.mxu0 %v427
    %551 = vmatpush.msra.mxu0 %v426
    %552 = vmatpush.msra.mxu0 %v425
    %553 = vmatpush.msra.mxu0 %v424
    %554 = vmatpush.msra.mxu0 %v423
    %555 = vmatpush.msra.mxu0 %v422
    %556 = vmatpush.msra.mxu0 %v421
    %557 = vmatpush.msra.mxu0 %v420
    %558 = vmatpush.msra.mxu0 %v419
    %559 = vmatpush.msra.mxu0 %v418
    %560 = vmatmul.f32.gmra.mxu0 %v541
    %v561 = vpop.f32.mrf.mxu0
    %v562 = vadd.f32 0.0, %v561
    %563 = vdwg.mxu0
    %v564 = vadd.f32 %v543, %v562
    %v565 = vmax.f32 %v564, 0.0
    %566 = vst [vmem:[%s252] sm:$0xff] %v565
    %v567 = vld [vmem:[%s277] sm:$0xff]
    %568 = vmatpush.msra.mxu0 %v433
    %569 = vmatpush.msra.mxu0 %v432
    %570 = vmatpush.msra.mxu0 %v431
    %571 = vmatpush.msra.mxu0 %v430
    %572 = vmatpush.msra.mxu0 %v429
    %573 = vmatpush.msra.mxu0 %v428
    %574 = vmatpush.msra.mxu0 %v427
    %575 = vmatpush.msra.mxu0 %v426
    %576 = vmatpush.msra.mxu0 %v425
    %577 = vmatpush.msra.mxu0 %v424
    %578 = vmatpush.msra.mxu0 %v423
    %579 = vmatpush.msra.mxu0 %v422
    %580 = vmatpush.msra.mxu0 %v421
    %581 = vmatpush.msra.mxu0 %v420
    %582 = vmatpush.msra.mxu0 %v419
    %583 = vmatpush.msra.mxu0 %v418
    %584 = vmatmul.f32.gmra.mxu0 %v565
    %v585 = vpop.f32.mrf.mxu0
    %v586 = vadd.f32 0.0, %v585
    %587 = vdwg.mxu0
    %v588 = vadd.f32 %v567, %v586
    %v589 = vmax.f32 %v588, 0.0
    %590 = vst [vmem:[%s277] sm:$0xff] %v589
    %v591 = vld [vmem:[%s302] sm:$0xff]
    %592 = vmatpush.msra.mxu0 %v433
    %593 = vmatpush.msra.mxu0 %v432
    %594 = vmatpush.msra.mxu0 %v431
    %595 = vmatpush.msra.mxu0 %v430
    %596 = vmatpush.msra.mxu0 %v429
    %597 = vmatpush.msra.mxu0 %v428
    %598 = vmatpush.msra.mxu0 %v427
    %599 = vmatpush.msra.mxu0 %v426
    %600 = vmatpush.msra.mxu0 %v425
    %601 = vmatpush.msra.mxu0 %v424
    %602 = vmatpush.msra.mxu0 %v423
    %603 = vmatpush.msra.mxu0 %v422
    %604 = vmatpush.msra.mxu0 %v421
    %605 = vmatpush.msra.mxu0 %v420
    %606 = vmatpush.msra.mxu0 %v419
    %607 = vmatpush.msra.mxu0 %v418
    %608 = vmatmul.f32.gmra.mxu0 %v589
    %v609 = vpop.f32.mrf.mxu0
    %v610 = vadd.f32 0.0, %v609
    %611 = vdwg.mxu0
    %v612 = vadd.f32 %v591, %v610
    %v613 = vmax.f32 %v612, 0.0
    %614 = vst [vmem:[%s302] sm:$0xff] %v613
    %v615 = vld [vmem:[%s327] sm:$0xff]
    %616 = vmatpush.msra.mxu0 %v433
    %617 = vmatpush.msra.mxu0 %v432
    %618 = vmatpush.msra.mxu0 %v431
    %619 = vmatpush.msra.mxu0 %v430
    %620 = vmatpush.msra.mxu0 %v429
    %621 = vmatpush.msra.mxu0 %v428
    %622 = vmatpush.msra.mxu0 %v427
    %623 = vmatpush.msra.mxu0 %v426
    %624 = vmatpush.msra.mxu0 %v425
    %625 = vmatpush.msra.mxu0 %v424
    %626 = vmatpush.msra.mxu0 %v423
    %627 = vmatpush.msra.mxu0 %v422
    %628 = vmatpush.msra.mxu0 %v421
    %629 = vmatpush.msra.mxu0 %v420
    %630 = vmatpush.msra.mxu0 %v419
    %631 = vmatpush.msra.mxu0 %v418
    %632 = vmatmul.f32.gmra.mxu0 %v613
    %v633 = vpop.f32.mrf.mxu0
    %v634 = vadd.f32 0.0, %v633
    %635 = vdwg.mxu0
    %v636 = vadd.f32 %v615, %v634
    %v637 = vmax.f32 %v636, 0.0
    %638 = vst [vmem:[%s327] sm:$0xff] %v637
    %v639 = vld [vmem:[%s352] sm:$0xff]
    %640 = vmatpush.msra.mxu0 %v433
    %641 = vmatpush.msra.mxu0 %v432
    %642 = vmatpush.msra.mxu0 %v431
    %643 = vmatpush.msra.mxu0 %v430
    %644 = vmatpush.msra.mxu0 %v429
    %645 = vmatpush.msra.mxu0 %v428
    %646 = vmatpush.msra.mxu0 %v427
    %647 = vmatpush.msra.mxu0 %v426
    %648 = vmatpush.msra.mxu0 %v425
    %649 = vmatpush.msra.mxu0 %v424
    %650 = vmatpush.msra.mxu0 %v423
    %651 = vmatpush.msra.mxu0 %v422
    %652 = vmatpush.msra.mxu0 %v421
    %653 = vmatpush.msra.mxu0 %v420
    %654 = vmatpush.msra.mxu0 %v419
    %655 = vmatpush.msra.mxu0 %v418
    %656 = vmatmul.f32.gmra.mxu0 %v637
    %v657 = vpop.f32.mrf.mxu0
    %v658 = vadd.f32 0.0, %v657
    %659 = vdwg.mxu0
    %v660 = vadd.f32 %v639, %v658
    %v661 = vmax.f32 %v660, 0.0
    %662 = vst [vmem:[%s352] sm:$0xff] %v661
    %v663 = vld [vmem:[%s377] sm:$0xff]
    %664 = vmatpush.msra.mxu0 %v433
    %665 = vmatpush.msra.mxu0 %v432
    %666 = vmatpush.msra.mxu0 %v431
    %667 = vmatpush.msra.mxu0 %v430
    %668 = vmatpush.msra.mxu0 %v429
    %669 = vmatpush.msra.mxu0 %v428
    %670 = vmatpush.msra.mxu0 %v427
    %671 = vmatpush.msra.mxu0 %v426
    %672 = vmatpush.msra.mxu0 %v425
    %673 = vmatpush.msra.mxu0 %v424
    %674 = vmatpush.msra.mxu0 %v423
    %675 = vmatpush.msra.mxu0 %v422
    %676 = vmatpush.msra.mxu0 %v421
    %677 = vmatpush.msra.mxu0 %v420
    %678 = vmatpush.msra.mxu0 %v419
    %679 = vmatpush.msra.mxu0 %v418
    %680 = vmatmul.f32.gmra.mxu0 %v661
    %v681 = vpop.f32.mrf.mxu0
    %v682 = vadd.f32 0.0, %v681
    %683 = vdwg.mxu0
    %v684 = vadd.f32 %v663, %v682
    %v685 = vmax.f32 %v684, 0.0
    %686 = vst [vmem:[%s377] sm:$0xff] %v685
    %v687 = vld [vmem:[#allocation2] sm:$0xff]
    %v688 = vld [vmem:[#allocation2 + $0x8] sm:$0xff]
    %v689 = vld [vmem:[#allocation2 + $0x10] sm:$0xff]
    %v690 = vld [vmem:[#allocation2 + $0x18] sm:$0xff]
    %v691 = vld [vmem:[#allocation2 + $0x20] sm:$0xff]
    %v692 = vld [vmem:[#allocation2 + $0x28] sm:$0xff]
    %v693 = vld [vmem:[#allocation2 + $0x30] sm:$0xff]
    %v694 = vld [vmem:[#allocation2 + $0x38] sm:$0xff]
    %v695 = vld [vmem:[#allocation10] sm:$0xff]
    %v696 = vld [vmem:[#allocation10 + $0x8] sm:$0xff]
    %v697 = vld [vmem:[#allocation10 + $0x10] sm:$0xff]
    %v698 = vld [vmem:[#allocation10 + $0x18] sm:$0xff]
    %v699 = vld [vmem:[#allocation10 + $0x20] sm:$0xff]
    %v700 = vld [vmem:[#allocation10 + $0x28] sm:$0xff]
    %v701 = vld [vmem:[#allocation10 + $0x30] sm:$0xff]
    %v702 = vld [vmem:[#allocation10 + $0x38] sm:$0xff]
    %v703 = vld [vmem:[#allocation10 + $0x40] sm:$0xff]
    %v704 = vld [vmem:[#allocation10 + $0x48] sm:$0xff]
    %v705 = vld [vmem:[#allocation10 + $0x50] sm:$0xff]
    %v706 = vld [vmem:[#allocation10 + $0x58] sm:$0xff]
    %v707 = vld [vmem:[#allocation10 + $0x60] sm:$0xff]
    %v708 = vld [vmem:[#allocation10 + $0x68] sm:$0xff]
    %v709 = vld [vmem:[#allocation10 + $0x70] sm:$0xff]
    %v710 = vld [vmem:[#allocation10 + $0x78] sm:$0xff]
    %v711 = vld [vmem:[%s8] sm:$0x1]
    %v713 = vperm.slane %v711, 0
    %715 = vmatpush.msra.mxu0 %v710
    %716 = vmatpush.msra.mxu0 %v709
    %717 = vmatpush.msra.mxu0 %v708
    %718 = vmatpush.msra.mxu0 %v707
    %719 = vmatpush.msra.mxu0 %v706
    %720 = vmatpush.msra.mxu0 %v705
    %721 = vmatpush.msra.mxu0 %v704
    %722 = vmatpush.msra.mxu0 %v703
    %723 = vmatpush.msra.mxu0 %v702
    %724 = vmatpush.msra.mxu0 %v701
    %725 = vmatpush.msra.mxu0 %v700
    %726 = vmatpush.msra.mxu0 %v699
    %727 = vmatpush.msra.mxu0 %v698
    %728 = vmatpush.msra.mxu0 %v697
    %729 = vmatpush.msra.mxu0 %v696
    %730 = vmatpush.msra.mxu0 %v695
    %731 = vmatmul.f32.gmra.mxu0 %v687
    %v732 = vpop.f32.mrf.mxu0
    %v733 = vadd.f32 %v713, %v732
    %734 = vmatmul.f32.gmra.mxu0 %v688
    %v735 = vpop.f32.mrf.mxu0
    %v736 = vadd.f32 %v713, %v735
    %737 = vmatmul.f32.gmra.mxu0 %v689
    %v738 = vpop.f32.mrf.mxu0
    %v739 = vadd.f32 %v713, %v738
    %740 = vmatmul.f32.gmra.mxu0 %v690
    %v741 = vpop.f32.mrf.mxu0
    %v742 = vadd.f32 %v713, %v741
    %743 = vmatmul.f32.gmra.mxu0 %v691
    %v744 = vpop.f32.mrf.mxu0
    %v745 = vadd.f32 %v713, %v744
    %746 = vmatmul.f32.gmra.mxu0 %v692
    %v747 = vpop.f32.mrf.mxu0
    %v748 = vadd.f32 %v713, %v747
    %749 = vmatmul.f32.gmra.mxu0 %v693
    %v750 = vpop.f32.mrf.mxu0
    %v751 = vadd.f32 %v713, %v750
    %752 = vmatmul.f32.gmra.mxu0 %v694
    %v753 = vpop.f32.mrf.mxu0
    %v754 = vadd.f32 %v713, %v753
    %755 = vdwg.mxu0
    %756 = vst [vmem:[%s9] sm:$0xff] %v733
    %757 = vst [vmem:[%s9 + $0x8] sm:$0xff] %v736
    %758 = vst [vmem:[%s9 + $0x10] sm:$0xff] %v739
    %759 = vst [vmem:[%s9 + $0x18] sm:$0xff] %v742
    %760 = vst [vmem:[%s9 + $0x20] sm:$0xff] %v745
    %761 = vst [vmem:[%s9 + $0x28] sm:$0xff] %v748
    %762 = vst [vmem:[%s9 + $0x30] sm:$0xff] %v751
    %763 = vst [vmem:[%s9 + $0x38] sm:$0xff] %v754
    // Predicated region
    $region58: #{character_rnn_forward.1} parent=1 // pred_check
      _
    $region59: #{character_rnn_forward.1} parent=1 // pred_check_branch
      %765 = sbr.rel (0) target = $region61
    $region60: #{character_rnn_forward.1} parent=1 // pred_region
      _
    $region61: #{character_rnn_forward.1} parent=1 // pred_fallthru
      _
    // Predicated region
    $region62: #{character_rnn_forward.1} parent=1 // pred_check
      _
    $region63: #{character_rnn_forward.1} parent=1 // pred_check_branch
      %767 = sbr.rel (0) target = $region65
    $region64: #{character_rnn_forward.1} parent=1 // pred_region
      _
    $region65: #{character_rnn_forward.1} parent=1 // pred_fallthru
      _
    %768 = vsyncpa [#allocation4], 1
    %769 = vsyncpa [#allocation6], 1
    %770 = vsyncpa [#allocation9], 1

</llo_original>
